<compile_context>
chip_gen: v5e
topology: v5e:2x2
jax: 0.10.0
libtpu: 0.0.40
codegen_flags: <defaults>
</compile_context>

<pallas_src>
import functools
from typing import NamedTuple

import jax
import jax.numpy as jnp
from jax.experimental import pallas as pl
from jax.experimental.pallas import tpu as pltpu

_LANE = 128
_SUBLANE = 8


def _round_up(n, m):
    return ((n + m - 1) // m) * m


class PreparedMLP(NamedTuple):
    """Padded, bf16-cast parameters of one MLP plus its logical output width."""
    layers: tuple          # ((W[in_p, out_p] bf16, b[1, out_p] f32), ...)
    out_dim: int


def prepare_mlp_params(params, *, weight_dtype=jnp.bfloat16):
    """Pad each (W[in,out], b[out]) to 128-lane multiples and cast W to bf16.

    Call this ONCE when parameters are created/updated, not per forward call:
    the zero-pad + cast would otherwise re-materialize every step under jit.
    Zero padding is mathematically exact: zero weight rows/cols contribute
    nothing and ReLU(0)=0 keeps padded lanes at zero through the network.
    """
    layers = []
    for w, b in params:
        in_d, out_d = w.shape
        in_p, out_p = _round_up(in_d, _LANE), _round_up(out_d, _LANE)
        wp = jnp.zeros((in_p, out_p), weight_dtype).at[:in_d, :out_d].set(
            w.astype(weight_dtype))
        bp = jnp.zeros((1, out_p), jnp.float32).at[0, :out_d].set(
            b.astype(jnp.float32))
        layers.append((wp, bp))
    return PreparedMLP(layers=tuple(layers), out_dim=params[-1][0].shape[1])


def _fused_mlp_kernel(layer_counts, *refs):
    """Fused forward for several MLPs in one kernel invocation.

    refs = (x_0..x_{k-1}, w/b pairs net 0, w/b pairs net 1, ..., o_0..o_{k-1})
    nn.Dropout(dropprob=0.0) and eval-mode dropout are identities -> no-op here.
    # TODO(synk): training-mode dropout (dropprob > 0) would need pltpu.prng_*.
    """
    n_nets = len(layer_counts)
    x_refs = refs[:n_nets]
    o_refs = refs[-n_nets:]
    wb = refs[n_nets:-n_nets]

    off = 0
    for k, n_layers in enumerate(layer_counts):
        params = wb[off:off + 2 * n_layers]
        off += 2 * n_layers

        h = x_refs[k][...]                       # f32 activation tile
        for i in range(n_layers):
            w = params[2 * i][...]               # bf16 [in_p, out_p]
            b = params[2 * i + 1][...]           # f32  [1, out_p]
            # bf16 x bf16 -> f32 accumulate: native MXU input on v5e/v6e/v7x.
            h = jnp.dot(h.astype(w.dtype), w,
                        preferred_element_type=jnp.float32) + b
            if i < n_layers - 1:
                h = jnp.maximum(h, 0.0)          # ReLU on hidden layers only
        o_refs[k][...] = h.astype(o_refs[k].dtype)
    # TODO(synk): on v6e/v7x, pack sibling nets into one block-diagonal chain
    # (256-wide dots) to fill the 256x256 MXU when per-net dims are ~128.


def _choose_batch_tile(batch, max_batch_tile):
    tb = min(max_batch_tile, _round_up(batch, _SUBLANE))
    # Prefer >= 2 grid steps (lets the "parallel" batch axis shard across v7x's
    # two TensorCores) as long as each tile keeps >= 128 rows of MXU occupancy.
    if tb >= 256:
        half = _round_up(-(-batch // 2), _SUBLANE)
        tb = max(128, min(tb, half))
    return tb


def _vmem_budget_bytes(headroom_bytes=12 << 20):
    cap = 64 << 20  # conservative default: v7x per-TensorCore VMEM
    try:
        cap = int(getattr(pltpu.get_tpu_info(), "vmem_capacity_bytes", cap))
    except Exception:
        pass
    return max(16 << 20, cap - headroom_bytes)


def fused_mlps_forward(xs, prepared_nets, *, max_batch_tile=512):
    """Run several MLPs (sharing a batch dim) in one fused Pallas call.

    xs:            tuple of [B, in_dim_k] arrays.
    prepared_nets: tuple of PreparedMLP (from prepare_mlp_params).
    Returns a tuple of [B, out_dim_k] f32 arrays.
    """
    assert len(xs) == len(prepared_nets) and len(xs) >= 1
    B = xs[0].shape[0]
    assert all(x.shape[0] == B for x in xs)

    in_p = [net.layers[0][0].shape[0] for net in prepared_nets]
    out_p = [net.layers[-1][0].shape[1] for net in prepared_nets]
    out_dims = [net.out_dim for net in prepared_nets]
    layer_counts = tuple(len(net.layers) for net in prepared_nets)

    tb = _choose_batch_tile(B, max_batch_tile)
    bp = _round_up(B, tb)
    grid = (bp // tb,)

    xs_padded = []
    for x, ip in zip(xs, in_p):
        x = x.astype(jnp.float32)
        if x.shape == (bp, ip):
            xs_padded.append(x)
        else:
            # TODO(synk): for very large B, pad only the trailing partial batch
            # tile (or zero a VMEM staging buffer in-kernel) instead of writing
            # a full padded HBM copy of the activations here.
            xp = jnp.zeros((bp, ip), jnp.float32).at[:B, :x.shape[1]].set(x)
            xs_padded.append(xp)

    flat_wb = []
    for net in prepared_nets:
        for w, b in net.layers:
            flat_wb.append(w)
            flat_wb.append(b)

    param_bytes = sum(int(a.size) * a.dtype.itemsize for a in flat_wb)
    flops = sum(2 * bp * w.shape[0] * w.shape[1]
                for net in prepared_nets for w, _ in net.layers)
    io_bytes = (param_bytes
                + sum(int(x.size) * x.dtype.itemsize for x in xs_padded)
                + sum(bp * op * 4 for op in out_p))
    cost = pl.CostEstimate(flops=flops, transcendentals=0,
                           bytes_accessed=io_bytes)
    vmem_budget = _vmem_budget_bytes()

    kernel = functools.partial(_fused_mlp_kernel, layer_counts)

    def build_and_call(single_buffer_weights):
        if single_buffer_weights:
            # Constant index_map -> the block never re-DMAs; 1 buffer suffices,
            # halving the resident-parameter VMEM footprint.
            wb_specs = [pl.BlockSpec(a.shape, lambda i: (0, 0),
                                     pipeline_mode=pl.Buffered(1))
                        for a in flat_wb]
            wb_bufs = 1
        else:
            wb_specs = [pl.BlockSpec(a.shape, lambda i: (0, 0))
                        for a in flat_wb]
            wb_bufs = 2
        x_specs = [pl.BlockSpec((tb, ip), lambda i: (i, 0)) for ip in in_p]
        in_specs = x_specs + wb_specs
        out_specs = tuple(pl.BlockSpec((tb, op), lambda i: (i, 0))
                          for op in out_p)
        out_shape = tuple(jax.ShapeDtypeStruct((bp, op), jnp.float32)
                          for op in out_p)

        # VMEM estimate: double-buffered activation tiles, weight buffers at
        # their actual multiplicity, plus in-kernel f32/bf16 activation temps.
        act_tile_bytes = 2 * tb * (sum(in_p) + sum(out_p)) * 4
        tmp_bytes = 0
        for net, ip in zip(prepared_nets, in_p):
            widest = max([ip] + [w.shape[1] for w, _ in net.layers])
            tmp_bytes += 3 * tb * widest * 4
        needed = (wb_bufs * param_bytes + act_tile_bytes + tmp_bytes
                  + (2 << 20))  # headroom for Mosaic internal scratch
        vmem_limit = int(min(max(needed, 16 << 20), vmem_budget))
        # TODO(synk): add a K/N-tiled (accumulator) fallback when resident
        # parameters alone exceed the per-generation VMEM budget.

        return pl.pallas_call(
            kernel,
            out_shape=out_shape,
            grid=grid,
            in_specs=in_specs,
            out_specs=out_specs,
            compiler_params=pltpu.CompilerParams(
                dimension_semantics=("parallel",),
                vmem_limit_bytes=vmem_limit,
            ),
            cost_estimate=cost,
        )(*xs_padded, *flat_wb)

    use_single_buffer = hasattr(pl, "Buffered")
    try:
        outs = build_and_call(use_single_buffer)
    except Exception:
        if not use_single_buffer:
            raise
        # Fallback: default double-buffered resident params (older JAX).
        outs = build_and_call(False)

    # Slice away batch / lane padding outside the kernel (lane-dense inside).
    return tuple(o[:B, :od] for o, od in zip(outs, out_dims))


def mlp_forward(x, prepared):
    """Single-MLP forward (PyTorch MLP.forward semantics, dropprob=0.0)."""
    return fused_mlps_forward((x,), (prepared,))[0]


def mmdcca_forward(x1, x2, phi_prepared, tau_prepared):
    """y1 = phi(grl(x1)), y2 = tau(grl(x2)) in one fused Pallas call.

    GradientReversalLayer only affects the backward pass; forward is identity.
    """
    return fused_mlps_forward((x1, x2), (phi_prepared, tau_prepared))


def init_mlp_params(key, input_d, structure, output_d):
    """Deterministic MLP parameter init (Kaiming-uniform-like), stored [in, out]."""
    dims = [input_d] + list(structure) + [output_d]
    params = []
    for i in range(len(dims) - 1):
        key, wk, bk = jax.random.split(key, 3)
        bound = 1.0 / jnp.sqrt(dims[i])
        w = jax.random.uniform(wk, (dims[i], dims[i + 1]), jnp.float32,
                               -bound, bound)
        b = jax.random.uniform(bk, (dims[i + 1],), jnp.float32, -bound, bound)
        params.append((w, b))
    return params, key


def mlp_reference(x, params):
    """Pure-JAX f32 reference for correctness checking."""
    h = x
    for i, (w, b) in enumerate(params):
        h = h @ w + b
        if i < len(params) - 1:
            h = jnp.maximum(h, 0.0)
    return h


if __name__ == "__main__":
    # Small shapes consistent with the module: two views of tabular features.
    batch = 8
    view1_dim = 16
    view2_dim = 12
    phi_size = [32, 32]
    tau_size = [32, 32]
    latent_dim = 1

    key = jax.random.PRNGKey(0)
    key, k1, k2 = jax.random.split(key, 3)
    x1 = jax.random.normal(k1, (batch, view1_dim), jnp.float32)
    x2 = jax.random.normal(k2, (batch, view2_dim), jnp.float32)

    phi_params, key = init_mlp_params(key, view1_dim, phi_size, latent_dim)
    tau_params, key = init_mlp_params(key, view2_dim, tau_size, latent_dim)

    # Parameter padding + bf16 cast happens once, outside the forward hot path.
    phi_prepared = prepare_mlp_params(phi_params)
    tau_prepared = prepare_mlp_params(tau_params)

    y1, y2 = mmdcca_forward(x1, x2, phi_prepared, tau_prepared)
    y_single = mlp_forward(x1, phi_prepared)
    jax.block_until_ready((y1, y2, y_single))

    # Check against a pure-JAX f32 reference; tolerance relaxed because the dot
    # operands are intentionally cast to bf16 (f32 accumulation is kept).
    r1 = mlp_reference(x1, phi_params)
    r2 = mlp_reference(x2, tau_params)
    assert y1.shape == (batch, latent_dim) and y2.shape == (batch, latent_dim)
    assert jnp.allclose(y1, r1, atol=5e-2, rtol=5e-2)
    assert jnp.allclose(y2, r2, atol=5e-2, rtol=5e-2)
    assert jnp.allclose(y_single, r1, atol=5e-2, rtol=5e-2)

    print("KERNEL_OK")
</pallas_src>

<mosaic_0001>
module attributes {stable_mosaic.version = 11 : i64} {
  func.func @_fused_mlp_kernel(%arg0: i32, %arg1: memref<8x128xf32, #tpu.memory_space<vmem>>, %arg2: memref<8x128xf32, #tpu.memory_space<vmem>>, %arg3: memref<128x128xbf16, #tpu.memory_space<vmem>>, %arg4: memref<1x128xf32, #tpu.memory_space<vmem>>, %arg5: memref<128x128xbf16, #tpu.memory_space<vmem>>, %arg6: memref<1x128xf32, #tpu.memory_space<vmem>>, %arg7: memref<128x128xbf16, #tpu.memory_space<vmem>>, %arg8: memref<1x128xf32, #tpu.memory_space<vmem>>, %arg9: memref<128x128xbf16, #tpu.memory_space<vmem>>, %arg10: memref<1x128xf32, #tpu.memory_space<vmem>>, %arg11: memref<128x128xbf16, #tpu.memory_space<vmem>>, %arg12: memref<1x128xf32, #tpu.memory_space<vmem>>, %arg13: memref<128x128xbf16, #tpu.memory_space<vmem>>, %arg14: memref<1x128xf32, #tpu.memory_space<vmem>>, %arg15: memref<8x128xf32, #tpu.memory_space<vmem>>, %arg16: memref<8x128xf32, #tpu.memory_space<vmem>>) attributes {dimension_semantics = [#tpu.dimension_semantics<parallel>], iteration_bounds = array<i64: 1>, scalar_prefetch = 0 : i64, scratch_operands = 0 : i64, tpu.core_type = #tpu.core_type<tc>, window_params = [{transform_indices = @transform_0, window_bounds = array<i64: 8, 128>}, {transform_indices = @transform_1, window_bounds = array<i64: 8, 128>}, {pipeline_mode = #tpu.pipeline_mode<synchronous>, transform_indices = @transform_2, window_bounds = array<i64: 128, 128>}, {pipeline_mode = #tpu.pipeline_mode<synchronous>, transform_indices = @transform_3, window_bounds = array<i64: 1, 128>}, {pipeline_mode = #tpu.pipeline_mode<synchronous>, transform_indices = @transform_4, window_bounds = array<i64: 128, 128>}, {pipeline_mode = #tpu.pipeline_mode<synchronous>, transform_indices = @transform_5, window_bounds = array<i64: 1, 128>}, {pipeline_mode = #tpu.pipeline_mode<synchronous>, transform_indices = @transform_6, window_bounds = array<i64: 128, 128>}, {pipeline_mode = #tpu.pipeline_mode<synchronous>, transform_indices = @transform_7, window_bounds = array<i64: 1, 128>}, {pipeline_mode = #tpu.pipeline_mode<synchronous>, transform_indices = @transform_8, window_bounds = array<i64: 128, 128>}, {pipeline_mode = #tpu.pipeline_mode<synchronous>, transform_indices = @transform_9, window_bounds = array<i64: 1, 128>}, {pipeline_mode = #tpu.pipeline_mode<synchronous>, transform_indices = @transform_10, window_bounds = array<i64: 128, 128>}, {pipeline_mode = #tpu.pipeline_mode<synchronous>, transform_indices = @transform_11, window_bounds = array<i64: 1, 128>}, {pipeline_mode = #tpu.pipeline_mode<synchronous>, transform_indices = @transform_12, window_bounds = array<i64: 128, 128>}, {pipeline_mode = #tpu.pipeline_mode<synchronous>, transform_indices = @transform_13, window_bounds = array<i64: 1, 128>}, {transform_indices = @transform_14, window_bounds = array<i64: 8, 128>}, {transform_indices = @transform_15, window_bounds = array<i64: 8, 128>}]} {
    %c0 = arith.constant 0 : index
    %c0_0 = arith.constant 0 : index
    %0 = vector.load %arg1[%c0, %c0_0] : memref<8x128xf32, #tpu.memory_space<vmem>>, vector<8x128xf32>
    %c0_1 = arith.constant 0 : index
    %c0_2 = arith.constant 0 : index
    %1 = vector.load %arg3[%c0_1, %c0_2] : memref<128x128xbf16, #tpu.memory_space<vmem>>, vector<128x128xbf16>
    %c0_3 = arith.constant 0 : index
    %c0_4 = arith.constant 0 : index
    %2 = vector.load %arg4[%c0_3, %c0_4] : memref<1x128xf32, #tpu.memory_space<vmem>>, vector<1x128xf32>
    %3 = arith.truncf %0 : vector<8x128xf32> to vector<8x128xbf16>
    %cst = arith.constant dense<0.000000e+00> : vector<8x128xf32>
    %4 = tpu.matmul %3, %1, %cst {dimension_numbers = #tpu.dot_dimension_numbers<[1], [0], [0], [1], [0, 0, 1, 1], [], []>} : vector<8x128xbf16>, vector<128x128xbf16>, vector<8x128xf32> -> vector<8x128xf32>
    %5 = vector.broadcast %2 : vector<1x128xf32> to vector<8x128xf32>
    %6 = arith.addf %4, %5 : vector<8x128xf32>
    %cst_5 = arith.constant 0.000000e+00 : f32
    %7 = vector.broadcast %cst_5 : f32 to vector<8x128xf32>
    %8 = arith.maximumf %6, %7 : vector<8x128xf32>
    %c0_6 = arith.constant 0 : index
    %c0_7 = arith.constant 0 : index
    %9 = vector.load %arg5[%c0_6, %c0_7] : memref<128x128xbf16, #tpu.memory_space<vmem>>, vector<128x128xbf16>
    %c0_8 = arith.constant 0 : index
    %c0_9 = arith.constant 0 : index
    %10 = vector.load %arg6[%c0_8, %c0_9] : memref<1x128xf32, #tpu.memory_space<vmem>>, vector<1x128xf32>
    %11 = arith.truncf %8 : vector<8x128xf32> to vector<8x128xbf16>
    %cst_10 = arith.constant dense<0.000000e+00> : vector<8x128xf32>
    %12 = tpu.matmul %11, %9, %cst_10 {dimension_numbers = #tpu.dot_dimension_numbers<[1], [0], [0], [1], [0, 0, 1, 1], [], []>} : vector<8x128xbf16>, vector<128x128xbf16>, vector<8x128xf32> -> vector<8x128xf32>
    %13 = vector.broadcast %10 : vector<1x128xf32> to vector<8x128xf32>
    %14 = arith.addf %12, %13 : vector<8x128xf32>
    %cst_11 = arith.constant 0.000000e+00 : f32
    %15 = vector.broadcast %cst_11 : f32 to vector<8x128xf32>
    %16 = arith.maximumf %14, %15 : vector<8x128xf32>
    %c0_12 = arith.constant 0 : index
    %c0_13 = arith.constant 0 : index
    %17 = vector.load %arg7[%c0_12, %c0_13] : memref<128x128xbf16, #tpu.memory_space<vmem>>, vector<128x128xbf16>
    %c0_14 = arith.constant 0 : index
    %c0_15 = arith.constant 0 : index
    %18 = vector.load %arg8[%c0_14, %c0_15] : memref<1x128xf32, #tpu.memory_space<vmem>>, vector<1x128xf32>
    %19 = arith.truncf %16 : vector<8x128xf32> to vector<8x128xbf16>
    %cst_16 = arith.constant dense<0.000000e+00> : vector<8x128xf32>
    %20 = tpu.matmul %19, %17, %cst_16 {dimension_numbers = #tpu.dot_dimension_numbers<[1], [0], [0], [1], [0, 0, 1, 1], [], []>} : vector<8x128xbf16>, vector<128x128xbf16>, vector<8x128xf32> -> vector<8x128xf32>
    %21 = vector.broadcast %18 : vector<1x128xf32> to vector<8x128xf32>
    %22 = arith.addf %20, %21 : vector<8x128xf32>
    %c0_17 = arith.constant 0 : index
    %c0_18 = arith.constant 0 : index
    %23 = vector.load %arg15[%c0_17, %c0_18] : memref<8x128xf32, #tpu.memory_space<vmem>>, vector<8x128xf32>
    tpu.vector_store %arg15[%c0_17, %c0_18], %22 {strides = array<i32>} : memref<8x128xf32, #tpu.memory_space<vmem>>, vector<8x128xf32>,
    %c0_19 = arith.constant 0 : index
    %c0_20 = arith.constant 0 : index
    %24 = vector.load %arg2[%c0_19, %c0_20] : memref<8x128xf32, #tpu.memory_space<vmem>>, vector<8x128xf32>
    %c0_21 = arith.constant 0 : index
    %c0_22 = arith.constant 0 : index
    %25 = vector.load %arg9[%c0_21, %c0_22] : memref<128x128xbf16, #tpu.memory_space<vmem>>, vector<128x128xbf16>
    %c0_23 = arith.constant 0 : index
    %c0_24 = arith.constant 0 : index
    %26 = vector.load %arg10[%c0_23, %c0_24] : memref<1x128xf32, #tpu.memory_space<vmem>>, vector<1x128xf32>
    %27 = arith.truncf %24 : vector<8x128xf32> to vector<8x128xbf16>
    %cst_25 = arith.constant dense<0.000000e+00> : vector<8x128xf32>
    %28 = tpu.matmul %27, %25, %cst_25 {dimension_numbers = #tpu.dot_dimension_numbers<[1], [0], [0], [1], [0, 0, 1, 1], [], []>} : vector<8x128xbf16>, vector<128x128xbf16>, vector<8x128xf32> -> vector<8x128xf32>
    %29 = vector.broadcast %26 : vector<1x128xf32> to vector<8x128xf32>
    %30 = arith.addf %28, %29 : vector<8x128xf32>
    %cst_26 = arith.constant 0.000000e+00 : f32
    %31 = vector.broadcast %cst_26 : f32 to vector<8x128xf32>
    %32 = arith.maximumf %30, %31 : vector<8x128xf32>
    %c0_27 = arith.constant 0 : index
    %c0_28 = arith.constant 0 : index
    %33 = vector.load %arg11[%c0_27, %c0_28] : memref<128x128xbf16, #tpu.memory_space<vmem>>, vector<128x128xbf16>
    %c0_29 = arith.constant 0 : index
    %c0_30 = arith.constant 0 : index
    %34 = vector.load %arg12[%c0_29, %c0_30] : memref<1x128xf32, #tpu.memory_space<vmem>>, vector<1x128xf32>
    %35 = arith.truncf %32 : vector<8x128xf32> to vector<8x128xbf16>
    %cst_31 = arith.constant dense<0.000000e+00> : vector<8x128xf32>
    %36 = tpu.matmul %35, %33, %cst_31 {dimension_numbers = #tpu.dot_dimension_numbers<[1], [0], [0], [1], [0, 0, 1, 1], [], []>} : vector<8x128xbf16>, vector<128x128xbf16>, vector<8x128xf32> -> vector<8x128xf32>
    %37 = vector.broadcast %34 : vector<1x128xf32> to vector<8x128xf32>
    %38 = arith.addf %36, %37 : vector<8x128xf32>
    %cst_32 = arith.constant 0.000000e+00 : f32
    %39 = vector.broadcast %cst_32 : f32 to vector<8x128xf32>
    %40 = arith.maximumf %38, %39 : vector<8x128xf32>
    %c0_33 = arith.constant 0 : index
    %c0_34 = arith.constant 0 : index
    %41 = vector.load %arg13[%c0_33, %c0_34] : memref<128x128xbf16, #tpu.memory_space<vmem>>, vector<128x128xbf16>
    %c0_35 = arith.constant 0 : index
    %c0_36 = arith.constant 0 : index
    %42 = vector.load %arg14[%c0_35, %c0_36] : memref<1x128xf32, #tpu.memory_space<vmem>>, vector<1x128xf32>
    %43 = arith.truncf %40 : vector<8x128xf32> to vector<8x128xbf16>
    %cst_37 = arith.constant dense<0.000000e+00> : vector<8x128xf32>
    %44 = tpu.matmul %43, %41, %cst_37 {dimension_numbers = #tpu.dot_dimension_numbers<[1], [0], [0], [1], [0, 0, 1, 1], [], []>} : vector<8x128xbf16>, vector<128x128xbf16>, vector<8x128xf32> -> vector<8x128xf32>
    %45 = vector.broadcast %42 : vector<1x128xf32> to vector<8x128xf32>
    %46 = arith.addf %44, %45 : vector<8x128xf32>
    %c0_38 = arith.constant 0 : index
    %c0_39 = arith.constant 0 : index
    %47 = vector.load %arg16[%c0_38, %c0_39] : memref<8x128xf32, #tpu.memory_space<vmem>>, vector<8x128xf32>
    tpu.vector_store %arg16[%c0_38, %c0_39], %46 {strides = array<i32>} : memref<8x128xf32, #tpu.memory_space<vmem>>, vector<8x128xf32>,
    return
  }
  func.func @transform_0(%arg0: i32) -> (i32, i32) {
    %c0_i32 = arith.constant 0 : i32
    %c0_i32_0 = arith.constant 0 : i32
    return %arg0, %c0_i32 : i32, i32
  }
  func.func @transform_1(%arg0: i32) -> (i32, i32) {
    %c0_i32 = arith.constant 0 : i32
    %c0_i32_0 = arith.constant 0 : i32
    return %arg0, %c0_i32 : i32, i32
  }
  func.func @transform_2(%arg0: i32) -> (i32, i32) {
    %c0_i32 = arith.constant 0 : i32
    %c0_i32_0 = arith.constant 0 : i32
    %c0_i32_1 = arith.constant 0 : i32
    return %c0_i32, %c0_i32_0 : i32, i32
  }
  func.func @transform_3(%arg0: i32) -> (i32, i32) {
    %c0_i32 = arith.constant 0 : i32
    %c0_i32_0 = arith.constant 0 : i32
    %c0_i32_1 = arith.constant 0 : i32
    return %c0_i32, %c0_i32_0 : i32, i32
  }
  func.func @transform_4(%arg0: i32) -> (i32, i32) {
    %c0_i32 = arith.constant 0 : i32
    %c0_i32_0 = arith.constant 0 : i32
    %c0_i32_1 = arith.constant 0 : i32
    return %c0_i32, %c0_i32_0 : i32, i32
  }
  func.func @transform_5(%arg0: i32) -> (i32, i32) {
    %c0_i32 = arith.constant 0 : i32
    %c0_i32_0 = arith.constant 0 : i32
    %c0_i32_1 = arith.constant 0 : i32
    return %c0_i32, %c0_i32_0 : i32, i32
  }
  func.func @transform_6(%arg0: i32) -> (i32, i32) {
    %c0_i32 = arith.constant 0 : i32
    %c0_i32_0 = arith.constant 0 : i32
    %c0_i32_1 = arith.constant 0 : i32
    return %c0_i32, %c0_i32_0 : i32, i32
  }
  func.func @transform_7(%arg0: i32) -> (i32, i32) {
    %c0_i32 = arith.constant 0 : i32
    %c0_i32_0 = arith.constant 0 : i32
    %c0_i32_1 = arith.constant 0 : i32
    return %c0_i32, %c0_i32_0 : i32, i32
  }
  func.func @transform_8(%arg0: i32) -> (i32, i32) {
    %c0_i32 = arith.constant 0 : i32
    %c0_i32_0 = arith.constant 0 : i32
    %c0_i32_1 = arith.constant 0 : i32
    return %c0_i32, %c0_i32_0 : i32, i32
  }
  func.func @transform_9(%arg0: i32) -> (i32, i32) {
    %c0_i32 = arith.constant 0 : i32
    %c0_i32_0 = arith.constant 0 : i32
    %c0_i32_1 = arith.constant 0 : i32
    return %c0_i32, %c0_i32_0 : i32, i32
  }
  func.func @transform_10(%arg0: i32) -> (i32, i32) {
    %c0_i32 = arith.constant 0 : i32
    %c0_i32_0 = arith.constant 0 : i32
    %c0_i32_1 = arith.constant 0 : i32
    return %c0_i32, %c0_i32_0 : i32, i32
  }
  func.func @transform_11(%arg0: i32) -> (i32, i32) {
    %c0_i32 = arith.constant 0 : i32
    %c0_i32_0 = arith.constant 0 : i32
    %c0_i32_1 = arith.constant 0 : i32
    return %c0_i32, %c0_i32_0 : i32, i32
  }
  func.func @transform_12(%arg0: i32) -> (i32, i32) {
    %c0_i32 = arith.constant 0 : i32
    %c0_i32_0 = arith.constant 0 : i32
    %c0_i32_1 = arith.constant 0 : i32
    return %c0_i32, %c0_i32_0 : i32, i32
  }
  func.func @transform_13(%arg0: i32) -> (i32, i32) {
    %c0_i32 = arith.constant 0 : i32
    %c0_i32_0 = arith.constant 0 : i32
    %c0_i32_1 = arith.constant 0 : i32
    return %c0_i32, %c0_i32_0 : i32, i32
  }
  func.func @transform_14(%arg0: i32) -> (i32, i32) {
    %c0_i32 = arith.constant 0 : i32
    %c0_i32_0 = arith.constant 0 : i32
    return %arg0, %c0_i32 : i32, i32
  }
  func.func @transform_15(%arg0: i32) -> (i32, i32) {
    %c0_i32 = arith.constant 0 : i32
    %c0_i32_0 = arith.constant 0 : i32
    return %arg0, %c0_i32 : i32, i32
  }
}

module attributes {stable_mosaic.version = 11 : i64} {
  func.func @_fused_mlp_kernel(%arg0: i32, %arg1: memref<8x128xf32, #tpu.memory_space<vmem>>, %arg2: memref<8x128xf32, #tpu.memory_space<vmem>>, %arg3: memref<128x128xbf16, #tpu.memory_space<vmem>>, %arg4: memref<1x128xf32, #tpu.memory_space<vmem>>, %arg5: memref<128x128xbf16, #tpu.memory_space<vmem>>, %arg6: memref<1x128xf32, #tpu.memory_space<vmem>>, %arg7: memref<128x128xbf16, #tpu.memory_space<vmem>>, %arg8: memref<1x128xf32, #tpu.memory_space<vmem>>, %arg9: memref<128x128xbf16, #tpu.memory_space<vmem>>, %arg10: memref<1x128xf32, #tpu.memory_space<vmem>>, %arg11: memref<128x128xbf16, #tpu.memory_space<vmem>>, %arg12: memref<1x128xf32, #tpu.memory_space<vmem>>, %arg13: memref<128x128xbf16, #tpu.memory_space<vmem>>, %arg14: memref<1x128xf32, #tpu.memory_space<vmem>>, %arg15: memref<8x128xf32, #tpu.memory_space<vmem>>, %arg16: memref<8x128xf32, #tpu.memory_space<vmem>>) attributes {dimension_semantics = [#tpu.dimension_semantics<parallel>], iteration_bounds = array<i64: 1>, scalar_prefetch = 0 : i64, scratch_operands = 0 : i64, tpu.core_type = #tpu.core_type<tc>, window_params = [{transform_indices = @transform_0, window_bounds = array<i64: 8, 128>}, {transform_indices = @transform_1, window_bounds = array<i64: 8, 128>}, {pipeline_mode = #tpu.pipeline_mode<synchronous>, transform_indices = @transform_2, window_bounds = array<i64: 128, 128>}, {pipeline_mode = #tpu.pipeline_mode<synchronous>, transform_indices = @transform_3, window_bounds = array<i64: 1, 128>}, {pipeline_mode = #tpu.pipeline_mode<synchronous>, transform_indices = @transform_4, window_bounds = array<i64: 128, 128>}, {pipeline_mode = #tpu.pipeline_mode<synchronous>, transform_indices = @transform_5, window_bounds = array<i64: 1, 128>}, {pipeline_mode = #tpu.pipeline_mode<synchronous>, transform_indices = @transform_6, window_bounds = array<i64: 128, 128>}, {pipeline_mode = #tpu.pipeline_mode<synchronous>, transform_indices = @transform_7, window_bounds = array<i64: 1, 128>}, {pipeline_mode = #tpu.pipeline_mode<synchronous>, transform_indices = @transform_8, window_bounds = array<i64: 128, 128>}, {pipeline_mode = #tpu.pipeline_mode<synchronous>, transform_indices = @transform_9, window_bounds = array<i64: 1, 128>}, {pipeline_mode = #tpu.pipeline_mode<synchronous>, transform_indices = @transform_10, window_bounds = array<i64: 128, 128>}, {pipeline_mode = #tpu.pipeline_mode<synchronous>, transform_indices = @transform_11, window_bounds = array<i64: 1, 128>}, {pipeline_mode = #tpu.pipeline_mode<synchronous>, transform_indices = @transform_12, window_bounds = array<i64: 128, 128>}, {pipeline_mode = #tpu.pipeline_mode<synchronous>, transform_indices = @transform_13, window_bounds = array<i64: 1, 128>}, {transform_indices = @transform_14, window_bounds = array<i64: 8, 128>}, {transform_indices = @transform_15, window_bounds = array<i64: 8, 128>}]} {
    %c0 = arith.constant 0 : index
    %c0_0 = arith.constant 0 : index
    %0 = vector.load %arg1[%c0, %c0_0] : memref<8x128xf32, #tpu.memory_space<vmem>>, vector<8x128xf32>
    %c0_1 = arith.constant 0 : index
    %c0_2 = arith.constant 0 : index
    %1 = vector.load %arg3[%c0_1, %c0_2] : memref<128x128xbf16, #tpu.memory_space<vmem>>, vector<128x128xbf16>
    %c0_3 = arith.constant 0 : index
    %c0_4 = arith.constant 0 : index
    %2 = vector.load %arg4[%c0_3, %c0_4] : memref<1x128xf32, #tpu.memory_space<vmem>>, vector<1x128xf32>
    %3 = arith.truncf %0 : vector<8x128xf32> to vector<8x128xbf16>
    %cst = arith.constant dense<0.000000e+00> : vector<8x128xf32>
    %4 = tpu.matmul %3, %1, %cst {dimension_numbers = #tpu.dot_dimension_numbers<[1], [0], [0], [1], [0, 0, 1, 1], [], []>} : vector<8x128xbf16>, vector<128x128xbf16>, vector<8x128xf32> -> vector<8x128xf32>
    %5 = vector.broadcast %2 : vector<1x128xf32> to vector<8x128xf32>
    %6 = arith.addf %4, %5 : vector<8x128xf32>
    %cst_5 = arith.constant 0.000000e+00 : f32
    %7 = vector.broadcast %cst_5 : f32 to vector<8x128xf32>
    %8 = arith.maximumf %6, %7 : vector<8x128xf32>
    %c0_6 = arith.constant 0 : index
    %c0_7 = arith.constant 0 : index
    %9 = vector.load %arg5[%c0_6, %c0_7] : memref<128x128xbf16, #tpu.memory_space<vmem>>, vector<128x128xbf16>
    %c0_8 = arith.constant 0 : index
    %c0_9 = arith.constant 0 : index
    %10 = vector.load %arg6[%c0_8, %c0_9] : memref<1x128xf32, #tpu.memory_space<vmem>>, vector<1x128xf32>
    %11 = arith.truncf %8 : vector<8x128xf32> to vector<8x128xbf16>
    %cst_10 = arith.constant dense<0.000000e+00> : vector<8x128xf32>
    %12 = tpu.matmul %11, %9, %cst_10 {dimension_numbers = #tpu.dot_dimension_numbers<[1], [0], [0], [1], [0, 0, 1, 1], [], []>} : vector<8x128xbf16>, vector<128x128xbf16>, vector<8x128xf32> -> vector<8x128xf32>
    %13 = vector.broadcast %10 : vector<1x128xf32> to vector<8x128xf32>
    %14 = arith.addf %12, %13 : vector<8x128xf32>
    %cst_11 = arith.constant 0.000000e+00 : f32
    %15 = vector.broadcast %cst_11 : f32 to vector<8x128xf32>
    %16 = arith.maximumf %14, %15 : vector<8x128xf32>
    %c0_12 = arith.constant 0 : index
    %c0_13 = arith.constant 0 : index
    %17 = vector.load %arg7[%c0_12, %c0_13] : memref<128x128xbf16, #tpu.memory_space<vmem>>, vector<128x128xbf16>
    %c0_14 = arith.constant 0 : index
    %c0_15 = arith.constant 0 : index
    %18 = vector.load %arg8[%c0_14, %c0_15] : memref<1x128xf32, #tpu.memory_space<vmem>>, vector<1x128xf32>
    %19 = arith.truncf %16 : vector<8x128xf32> to vector<8x128xbf16>
    %cst_16 = arith.constant dense<0.000000e+00> : vector<8x128xf32>
    %20 = tpu.matmul %19, %17, %cst_16 {dimension_numbers = #tpu.dot_dimension_numbers<[1], [0], [0], [1], [0, 0, 1, 1], [], []>} : vector<8x128xbf16>, vector<128x128xbf16>, vector<8x128xf32> -> vector<8x128xf32>
    %21 = vector.broadcast %18 : vector<1x128xf32> to vector<8x128xf32>
    %22 = arith.addf %20, %21 : vector<8x128xf32>
    %c0_17 = arith.constant 0 : index
    %c0_18 = arith.constant 0 : index
    %23 = vector.load %arg15[%c0_17, %c0_18] : memref<8x128xf32, #tpu.memory_space<vmem>>, vector<8x128xf32>
    tpu.vector_store %arg15[%c0_17, %c0_18], %22 {strides = array<i32>} : memref<8x128xf32, #tpu.memory_space<vmem>>, vector<8x128xf32>,
    %c0_19 = arith.constant 0 : index
    %c0_20 = arith.constant 0 : index
    %24 = vector.load %arg2[%c0_19, %c0_20] : memref<8x128xf32, #tpu.memory_space<vmem>>, vector<8x128xf32>
    %c0_21 = arith.constant 0 : index
    %c0_22 = arith.constant 0 : index
    %25 = vector.load %arg9[%c0_21, %c0_22] : memref<128x128xbf16, #tpu.memory_space<vmem>>, vector<128x128xbf16>
    %c0_23 = arith.constant 0 : index
    %c0_24 = arith.constant 0 : index
    %26 = vector.load %arg10[%c0_23, %c0_24] : memref<1x128xf32, #tpu.memory_space<vmem>>, vector<1x128xf32>
    %27 = arith.truncf %24 : vector<8x128xf32> to vector<8x128xbf16>
    %cst_25 = arith.constant dense<0.000000e+00> : vector<8x128xf32>
    %28 = tpu.matmul %27, %25, %cst_25 {dimension_numbers = #tpu.dot_dimension_numbers<[1], [0], [0], [1], [0, 0, 1, 1], [], []>} : vector<8x128xbf16>, vector<128x128xbf16>, vector<8x128xf32> -> vector<8x128xf32>
    %29 = vector.broadcast %26 : vector<1x128xf32> to vector<8x128xf32>
    %30 = arith.addf %28, %29 : vector<8x128xf32>
    %cst_26 = arith.constant 0.000000e+00 : f32
    %31 = vector.broadcast %cst_26 : f32 to vector<8x128xf32>
    %32 = arith.maximumf %30, %31 : vector<8x128xf32>
    %c0_27 = arith.constant 0 : index
    %c0_28 = arith.constant 0 : index
    %33 = vector.load %arg11[%c0_27, %c0_28] : memref<128x128xbf16, #tpu.memory_space<vmem>>, vector<128x128xbf16>
    %c0_29 = arith.constant 0 : index
    %c0_30 = arith.constant 0 : index
    %34 = vector.load %arg12[%c0_29, %c0_30] : memref<1x128xf32, #tpu.memory_space<vmem>>, vector<1x128xf32>
    %35 = arith.truncf %32 : vector<8x128xf32> to vector<8x128xbf16>
    %cst_31 = arith.constant dense<0.000000e+00> : vector<8x128xf32>
    %36 = tpu.matmul %35, %33, %cst_31 {dimension_numbers = #tpu.dot_dimension_numbers<[1], [0], [0], [1], [0, 0, 1, 1], [], []>} : vector<8x128xbf16>, vector<128x128xbf16>, vector<8x128xf32> -> vector<8x128xf32>
    %37 = vector.broadcast %34 : vector<1x128xf32> to vector<8x128xf32>
    %38 = arith.addf %36, %37 : vector<8x128xf32>
    %cst_32 = arith.constant 0.000000e+00 : f32
    %39 = vector.broadcast %cst_32 : f32 to vector<8x128xf32>
    %40 = arith.maximumf %38, %39 : vector<8x128xf32>
    %c0_33 = arith.constant 0 : index
    %c0_34 = arith.constant 0 : index
    %41 = vector.load %arg13[%c0_33, %c0_34] : memref<128x128xbf16, #tpu.memory_space<vmem>>, vector<128x128xbf16>
    %c0_35 = arith.constant 0 : index
    %c0_36 = arith.constant 0 : index
    %42 = vector.load %arg14[%c0_35, %c0_36] : memref<1x128xf32, #tpu.memory_space<vmem>>, vector<1x128xf32>
    %43 = arith.truncf %40 : vector<8x128xf32> to vector<8x128xbf16>
    %cst_37 = arith.constant dense<0.000000e+00> : vector<8x128xf32>
    %44 = tpu.matmul %43, %41, %cst_37 {dimension_numbers = #tpu.dot_dimension_numbers<[1], [0], [0], [1], [0, 0, 1, 1], [], []>} : vector<8x128xbf16>, vector<128x128xbf16>, vector<8x128xf32> -> vector<8x128xf32>
    %45 = vector.broadcast %42 : vector<1x128xf32> to vector<8x128xf32>
    %46 = arith.addf %44, %45 : vector<8x128xf32>
    %c0_38 = arith.constant 0 : index
    %c0_39 = arith.constant 0 : index
    %47 = vector.load %arg16[%c0_38, %c0_39] : memref<8x128xf32, #tpu.memory_space<vmem>>, vector<8x128xf32>
    tpu.vector_store %arg16[%c0_38, %c0_39], %46 {strides = array<i32>} : memref<8x128xf32, #tpu.memory_space<vmem>>, vector<8x128xf32>,
    return
  }
  func.func @transform_0(%arg0: i32) -> (i32, i32) {
    %c0_i32 = arith.constant 0 : i32
    %c0_i32_0 = arith.constant 0 : i32
    return %arg0, %c0_i32 : i32, i32
  }
  func.func @transform_1(%arg0: i32) -> (i32, i32) {
    %c0_i32 = arith.constant 0 : i32
    %c0_i32_0 = arith.constant 0 : i32
    return %arg0, %c0_i32 : i32, i32
  }
  func.func @transform_2(%arg0: i32) -> (i32, i32) {
    %c0_i32 = arith.constant 0 : i32
    %c0_i32_0 = arith.constant 0 : i32
    %c0_i32_1 = arith.constant 0 : i32
    return %c0_i32, %c0_i32_0 : i32, i32
  }
  func.func @transform_3(%arg0: i32) -> (i32, i32) {
    %c0_i32 = arith.constant 0 : i32
    %c0_i32_0 = arith.constant 0 : i32
    %c0_i32_1 = arith.constant 0 : i32
    return %c0_i32, %c0_i32_0 : i32, i32
  }
  func.func @transform_4(%arg0: i32) -> (i32, i32) {
    %c0_i32 = arith.constant 0 : i32
    %c0_i32_0 = arith.constant 0 : i32
    %c0_i32_1 = arith.constant 0 : i32
    return %c0_i32, %c0_i32_0 : i32, i32
  }
  func.func @transform_5(%arg0: i32) -> (i32, i32) {
    %c0_i32 = arith.constant 0 : i32
    %c0_i32_0 = arith.constant 0 : i32
    %c0_i32_1 = arith.constant 0 : i32
    return %c0_i32, %c0_i32_0 : i32, i32
  }
  func.func @transform_6(%arg0: i32) -> (i32, i32) {
    %c0_i32 = arith.constant 0 : i32
    %c0_i32_0 = arith.constant 0 : i32
    %c0_i32_1 = arith.constant 0 : i32
    return %c0_i32, %c0_i32_0 : i32, i32
  }
  func.func @transform_7(%arg0: i32) -> (i32, i32) {
    %c0_i32 = arith.constant 0 : i32
    %c0_i32_0 = arith.constant 0 : i32
    %c0_i32_1 = arith.constant 0 : i32
    return %c0_i32, %c0_i32_0 : i32, i32
  }
  func.func @transform_8(%arg0: i32) -> (i32, i32) {
    %c0_i32 = arith.constant 0 : i32
    %c0_i32_0 = arith.constant 0 : i32
    %c0_i32_1 = arith.constant 0 : i32
    return %c0_i32, %c0_i32_0 : i32, i32
  }
  func.func @transform_9(%arg0: i32) -> (i32, i32) {
    %c0_i32 = arith.constant 0 : i32
    %c0_i32_0 = arith.constant 0 : i32
    %c0_i32_1 = arith.constant 0 : i32
    return %c0_i32, %c0_i32_0 : i32, i32
  }
  func.func @transform_10(%arg0: i32) -> (i32, i32) {
    %c0_i32 = arith.constant 0 : i32
    %c0_i32_0 = arith.constant 0 : i32
    %c0_i32_1 = arith.constant 0 : i32
    return %c0_i32, %c0_i32_0 : i32, i32
  }
  func.func @transform_11(%arg0: i32) -> (i32, i32) {
    %c0_i32 = arith.constant 0 : i32
    %c0_i32_0 = arith.constant 0 : i32
    %c0_i32_1 = arith.constant 0 : i32
    return %c0_i32, %c0_i32_0 : i32, i32
  }
  func.func @transform_12(%arg0: i32) -> (i32, i32) {
    %c0_i32 = arith.constant 0 : i32
    %c0_i32_0 = arith.constant 0 : i32
    %c0_i32_1 = arith.constant 0 : i32
    return %c0_i32, %c0_i32_0 : i32, i32
  }
  func.func @transform_13(%arg0: i32) -> (i32, i32) {
    %c0_i32 = arith.constant 0 : i32
    %c0_i32_0 = arith.constant 0 : i32
    %c0_i32_1 = arith.constant 0 : i32
    return %c0_i32, %c0_i32_0 : i32, i32
  }
  func.func @transform_14(%arg0: i32) -> (i32, i32) {
    %c0_i32 = arith.constant 0 : i32
    %c0_i32_0 = arith.constant 0 : i32
    return %arg0, %c0_i32 : i32, i32
  }
  func.func @transform_15(%arg0: i32) -> (i32, i32) {
    %c0_i32 = arith.constant 0 : i32
    %c0_i32_0 = arith.constant 0 : i32
    return %arg0, %c0_i32 : i32, i32
  }
}

</mosaic_0001>

<llo_original>
// kernel: tpu_custom_call.1
$region0: #{tpu_custom_call.1}
  #allocation0 [shape = 'u32[]', space=smem, size = 0x4, offset = 0x4, fixed_abs, tag = 'smem constant byte address 0x4 - core index']
  #allocation1 [shape = 'u32[72,128]{1,0:T(1,128)}', space=vmem, size = 0x9000, scoped, tag = 'internal scratch']
  %s0 = inlined_call_operand.hbm [shape: f32[8,128], index: 0, kind: input, shape index: {}]
  %s1 = inlined_call_operand.hbm [shape: f32[8,128], index: 1, kind: input, shape index: {}]
  %s2 = inlined_call_operand.hbm [shape: bf16[128,128], index: 2, kind: input, shape index: {}]
  %s3 = inlined_call_operand.vmem [shape: f32[1,128], index: 3, kind: input, shape index: {}]
  %s4 = inlined_call_operand.hbm [shape: bf16[128,128], index: 4, kind: input, shape index: {}]
  %s5 = inlined_call_operand.vmem [shape: f32[1,128], index: 5, kind: input, shape index: {}]
  %s6 = inlined_call_operand.hbm [shape: bf16[128,128], index: 6, kind: input, shape index: {}]
  %s7 = inlined_call_operand.vmem [shape: f32[1,128], index: 7, kind: input, shape index: {}]
  %s8 = inlined_call_operand.hbm [shape: bf16[128,128], index: 8, kind: input, shape index: {}]
  %s9 = inlined_call_operand.vmem [shape: f32[1,128], index: 9, kind: input, shape index: {}]
  %s10 = inlined_call_operand.hbm [shape: bf16[128,128], index: 10, kind: input, shape index: {}]
  %s11 = inlined_call_operand.vmem [shape: f32[1,128], index: 11, kind: input, shape index: {}]
  %s12 = inlined_call_operand.hbm [shape: bf16[128,128], index: 12, kind: input, shape index: {}]
  %s13 = inlined_call_operand.vmem [shape: f32[1,128], index: 13, kind: input, shape index: {}]
  %s14 = inlined_call_operand.hbm [shape: f32[8,128], index: 14, kind: output, shape index: {0}]
  %s15 = inlined_call_operand.hbm [shape: f32[8,128], index: 15, kind: output, shape index: {1}]
  %16 = xla_tuple %s14, %s15
  %s17 = sld [smem:[#allocation0]]
  $region106: #{tpu_custom_call.1} parent=0
    _
  %s19 = ssub.s32 1, %s17
  %s20 = scalar_select 0, %s19, %s17
  $region1: #{tpu_custom_call.1} parent=0
    #allocation2 [shape = 'u8[4096]{0}', space=vmem, size = 0x1000, scoped, tag = 'input window, operand 0, single buffered']
    #allocation3 [shape = 's32[1]{0}', space=sflag, size = 0x4, scoped, tag = 'scoped memory for tpu_custom_call.1']
    #allocation4 [shape = 's32[1]{0}', space=sflag, size = 0x4, scoped, tag = 'scoped memory for tpu_custom_call.1']
    #allocation5 [shape = 'u8[4096]{0}', space=vmem, size = 0x1000, scoped, tag = 'input window, operand 1, single buffered']
    #allocation6 [shape = 's32[1]{0}', space=sflag, size = 0x4, scoped, tag = 'scoped memory for tpu_custom_call.1']
    #allocation7 [shape = 'u8[32768]{0}', space=vmem, size = 0x8000, scoped, tag = 'input window, operand 2, single buffered']
    #allocation8 [shape = 'u8[32768]{0}', space=vmem, size = 0x8000, scoped, tag = 'input window, operand 4, single buffered']
    #allocation9 [shape = 's32[1]{0}', space=sflag, size = 0x4, scoped, tag = 'scoped memory for tpu_custom_call.1']
    #allocation10 [shape = 'u8[32768]{0}', space=vmem, size = 0x8000, scoped, tag = 'input window, operand 6, single buffered']
    #allocation11 [shape = 'u8[32768]{0}', space=vmem, size = 0x8000, scoped, tag = 'input window, operand 8, single buffered']
    #allocation12 [shape = 's32[1]{0}', space=sflag, size = 0x4, scoped, tag = 'scoped memory for tpu_custom_call.1']
    #allocation13 [shape = 'u8[32768]{0}', space=vmem, size = 0x8000, scoped, tag = 'input window, operand 10, single buffered']
    #allocation14 [shape = 'u8[32768]{0}', space=vmem, size = 0x8000, scoped, tag = 'input window, operand 12, single buffered']
    #allocation15 [shape = 's32[1]{0}', space=sflag, size = 0x4, scoped, tag = 'scoped memory for tpu_custom_call.1']
    #allocation16 [shape = 'u8[4096]{0}', space=vmem, size = 0x1000, scoped, tag = 'output window, operand 0, single buffered']
    #allocation17 [shape = 'u8[4096]{0}', space=vmem, size = 0x1000, scoped, tag = 'output window, operand 1, single buffered']
    #allocation18 [shape = 's32[1]{0}', space=sflag, size = 0x4, scoped, tag = 'scoped memory for tpu_custom_call.1']
    %21 = vsyncpa [#allocation3], 0
    %22 = vsyncpa [#allocation6], 0
    %23 = vsyncpa [#allocation9], 0
    %24 = vsyncpa [#allocation12], 0
    %25 = vsyncpa [#allocation15], 0
    %26 = vsyncpa [#allocation4], 0
    %27 = vsyncpa [#allocation18], 0
    // Predicated region
    $region2: #{tpu_custom_call.1} parent=1 // pred_check
      _
    $region3: #{tpu_custom_call.1} parent=1 // pred_check_branch
      %29 = sbr.rel (0) target = $region5
    $region4: #{tpu_custom_call.1} parent=1 // pred_region
      %31 = vsyncadd [#allocation3], 0
      %s33 = sshll.u32 %s0, 4
      %s34 = int_to_ptr.hbm [resolvable:$true] %s33
      %s35 = sshll.u32 [#allocation2], 4
      %s36 = int_to_ptr.vmem [resolvable:$true] %s35
      %38 = dma.hbm_to_vmem [thread:$0]  %s34, 128, %s36, [#allocation3]
    $region5: #{tpu_custom_call.1} parent=1 // pred_fallthru
      _
    // Predicated region
    $region6: #{tpu_custom_call.1} parent=1 // pred_check
      _
    $region7: #{tpu_custom_call.1} parent=1 // pred_check_branch
      %40 = sbr.rel (0) target = $region9
    $region8: #{tpu_custom_call.1} parent=1 // pred_region
      %42 = vsyncadd [#allocation6], 0
      %s44 = sshll.u32 %s1, 4
      %s45 = int_to_ptr.hbm [resolvable:$true] %s44
      %s46 = sshll.u32 [#allocation5], 4
      %s47 = int_to_ptr.vmem [resolvable:$true] %s46
      %49 = dma.hbm_to_vmem [thread:$0]  %s45, 128, %s47, [#allocation6]
    $region9: #{tpu_custom_call.1} parent=1 // pred_fallthru
      _
    // Predicated region
    $region10: #{tpu_custom_call.1} parent=1 // pred_check
      _
    $region11: #{tpu_custom_call.1} parent=1 // pred_check_branch
      %51 = sbr.rel (0) target = $region13
    $region12: #{tpu_custom_call.1} parent=1 // pred_region
      %53 = vsyncadd [#allocation6], 0
      %s54 = sshll.u32 %s2, 4
      %s55 = int_to_ptr.hbm [resolvable:$true] %s54
      %s56 = sshll.u32 [#allocation7], 4
      %s57 = int_to_ptr.vmem [resolvable:$true] %s56
      %62 = dma.hbm_to_vmem [thread:$0]  %s55, 1024, %s57, [#allocation6], 64, 64, 4
    $region13: #{tpu_custom_call.1} parent=1 // pred_fallthru
      _
    // Predicated region
    $region14: #{tpu_custom_call.1} parent=1 // pred_check
      _
    $region15: #{tpu_custom_call.1} parent=1 // pred_check_branch
      %64 = sbr.rel (0) target = $region17
    $region16: #{tpu_custom_call.1} parent=1 // pred_region
      _
    $region17: #{tpu_custom_call.1} parent=1 // pred_fallthru
      _
    // Predicated region
    $region18: #{tpu_custom_call.1} parent=1 // pred_check
      _
    $region19: #{tpu_custom_call.1} parent=1 // pred_check_branch
      %66 = sbr.rel (0) target = $region21
    $region20: #{tpu_custom_call.1} parent=1 // pred_region
      %68 = vsyncadd [#allocation9], 0
      %s69 = sshll.u32 %s4, 4
      %s70 = int_to_ptr.hbm [resolvable:$true] %s69
      %s71 = sshll.u32 [#allocation8], 4
      %s72 = int_to_ptr.vmem [resolvable:$true] %s71
      %77 = dma.hbm_to_vmem [thread:$0]  %s70, 1024, %s72, [#allocation9], 64, 64, 4
    $region21: #{tpu_custom_call.1} parent=1 // pred_fallthru
      _
    // Predicated region
    $region22: #{tpu_custom_call.1} parent=1 // pred_check
      _
    $region23: #{tpu_custom_call.1} parent=1 // pred_check_branch
      %79 = sbr.rel (0) target = $region25
    $region24: #{tpu_custom_call.1} parent=1 // pred_region
      _
    $region25: #{tpu_custom_call.1} parent=1 // pred_fallthru
      _
    // Predicated region
    $region26: #{tpu_custom_call.1} parent=1 // pred_check
      _
    $region27: #{tpu_custom_call.1} parent=1 // pred_check_branch
      %81 = sbr.rel (0) target = $region29
    $region28: #{tpu_custom_call.1} parent=1 // pred_region
      %83 = vsyncadd [#allocation9], 0
      %s84 = sshll.u32 %s6, 4
      %s85 = int_to_ptr.hbm [resolvable:$true] %s84
      %s86 = sshll.u32 [#allocation10], 4
      %s87 = int_to_ptr.vmem [resolvable:$true] %s86
      %92 = dma.hbm_to_vmem [thread:$0]  %s85, 1024, %s87, [#allocation9], 64, 64, 4
    $region29: #{tpu_custom_call.1} parent=1 // pred_fallthru
      _
    // Predicated region
    $region30: #{tpu_custom_call.1} parent=1 // pred_check
      _
    $region31: #{tpu_custom_call.1} parent=1 // pred_check_branch
      %94 = sbr.rel (0) target = $region33
    $region32: #{tpu_custom_call.1} parent=1 // pred_region
      _
    $region33: #{tpu_custom_call.1} parent=1 // pred_fallthru
      _
    // Predicated region
    $region34: #{tpu_custom_call.1} parent=1 // pred_check
      _
    $region35: #{tpu_custom_call.1} parent=1 // pred_check_branch
      %96 = sbr.rel (0) target = $region37
    $region36: #{tpu_custom_call.1} parent=1 // pred_region
      %98 = vsyncadd [#allocation12], 0
      %s99 = sshll.u32 %s8, 4
      %s100 = int_to_ptr.hbm [resolvable:$true] %s99
      %s101 = sshll.u32 [#allocation11], 4
      %s102 = int_to_ptr.vmem [resolvable:$true] %s101
      %107 = dma.hbm_to_vmem [thread:$0]  %s100, 1024, %s102, [#allocation12], 64, 64, 4
    $region37: #{tpu_custom_call.1} parent=1 // pred_fallthru
      _
    // Predicated region
    $region38: #{tpu_custom_call.1} parent=1 // pred_check
      _
    $region39: #{tpu_custom_call.1} parent=1 // pred_check_branch
      %109 = sbr.rel (0) target = $region41
    $region40: #{tpu_custom_call.1} parent=1 // pred_region
      _
    $region41: #{tpu_custom_call.1} parent=1 // pred_fallthru
      _
    // Predicated region
    $region42: #{tpu_custom_call.1} parent=1 // pred_check
      _
    $region43: #{tpu_custom_call.1} parent=1 // pred_check_branch
      %111 = sbr.rel (0) target = $region45
    $region44: #{tpu_custom_call.1} parent=1 // pred_region
      %113 = vsyncadd [#allocation12], 0
      %s114 = sshll.u32 %s10, 4
      %s115 = int_to_ptr.hbm [resolvable:$true] %s114
      %s116 = sshll.u32 [#allocation13], 4
      %s117 = int_to_ptr.vmem [resolvable:$true] %s116
      %122 = dma.hbm_to_vmem [thread:$0]  %s115, 1024, %s117, [#allocation12], 64, 64, 4
    $region45: #{tpu_custom_call.1} parent=1 // pred_fallthru
      _
    // Predicated region
    $region46: #{tpu_custom_call.1} parent=1 // pred_check
      _
    $region47: #{tpu_custom_call.1} parent=1 // pred_check_branch
      %124 = sbr.rel (0) target = $region49
    $region48: #{tpu_custom_call.1} parent=1 // pred_region
      _
    $region49: #{tpu_custom_call.1} parent=1 // pred_fallthru
      _
    // Predicated region
    $region50: #{tpu_custom_call.1} parent=1 // pred_check
      _
    $region51: #{tpu_custom_call.1} parent=1 // pred_check_branch
      %126 = sbr.rel (0) target = $region53
    $region52: #{tpu_custom_call.1} parent=1 // pred_region
      %128 = vsyncadd [#allocation15], 0
      %s129 = sshll.u32 %s12, 4
      %s130 = int_to_ptr.hbm [resolvable:$true] %s129
      %s131 = sshll.u32 [#allocation14], 4
      %s132 = int_to_ptr.vmem [resolvable:$true] %s131
      %137 = dma.hbm_to_vmem [thread:$0]  %s130, 1024, %s132, [#allocation15], 64, 64, 4
    $region53: #{tpu_custom_call.1} parent=1 // pred_fallthru
      _
    // Predicated region
    $region54: #{tpu_custom_call.1} parent=1 // pred_check
      _
    $region55: #{tpu_custom_call.1} parent=1 // pred_check_branch
      %139 = sbr.rel (0) target = $region57
    $region56: #{tpu_custom_call.1} parent=1 // pred_region
      _
    $region57: #{tpu_custom_call.1} parent=1 // pred_fallthru
      _
    // Predicated region
    $region58: #{tpu_custom_call.1} parent=1 // pred_check
      _
    $region59: #{tpu_custom_call.1} parent=1 // pred_check_branch
      %141 = sbr.rel (0) target = $region61
    $region60: #{tpu_custom_call.1} parent=1 // pred_region
      %143 = dma.done [#allocation3], 128
    $region61: #{tpu_custom_call.1} parent=1 // pred_fallthru
      _
    // Predicated region
    $region62: #{tpu_custom_call.1} parent=1 // pred_check
      _
    $region63: #{tpu_custom_call.1} parent=1 // pred_check_branch
      %145 = sbr.rel (0) target = $region65
    $region64: #{tpu_custom_call.1} parent=1 // pred_region
      %147 = dma.done [#allocation6], 128
    $region65: #{tpu_custom_call.1} parent=1 // pred_fallthru
      _
    // Predicated region
    $region66: #{tpu_custom_call.1} parent=1 // pred_check
      _
    $region67: #{tpu_custom_call.1} parent=1 // pred_check_branch
      %149 = sbr.rel (0) target = $region69
    $region68: #{tpu_custom_call.1} parent=1 // pred_region
      %151 = dma.done [#allocation6], 1024
    $region69: #{tpu_custom_call.1} parent=1 // pred_fallthru
      _
    // Predicated region
    $region70: #{tpu_custom_call.1} parent=1 // pred_check
      _
    $region71: #{tpu_custom_call.1} parent=1 // pred_check_branch
      %153 = sbr.rel (0) target = $region73
    $region72: #{tpu_custom_call.1} parent=1 // pred_region
      %155 = dma.done [#allocation9], 1024
    $region73: #{tpu_custom_call.1} parent=1 // pred_fallthru
      _
    // Predicated region
    $region74: #{tpu_custom_call.1} parent=1 // pred_check
      _
    $region75: #{tpu_custom_call.1} parent=1 // pred_check_branch
      %157 = sbr.rel (0) target = $region77
    $region76: #{tpu_custom_call.1} parent=1 // pred_region
      %159 = dma.done [#allocation9], 1024
    $region77: #{tpu_custom_call.1} parent=1 // pred_fallthru
      _
    // Predicated region
    $region78: #{tpu_custom_call.1} parent=1 // pred_check
      _
    $region79: #{tpu_custom_call.1} parent=1 // pred_check_branch
      %161 = sbr.rel (0) target = $region81
    $region80: #{tpu_custom_call.1} parent=1 // pred_region
      %163 = dma.done [#allocation12], 1024
    $region81: #{tpu_custom_call.1} parent=1 // pred_fallthru
      _
    // Predicated region
    $region82: #{tpu_custom_call.1} parent=1 // pred_check
      _
    $region83: #{tpu_custom_call.1} parent=1 // pred_check_branch
      %165 = sbr.rel (0) target = $region85
    $region84: #{tpu_custom_call.1} parent=1 // pred_region
      %167 = dma.done [#allocation12], 1024
    $region85: #{tpu_custom_call.1} parent=1 // pred_fallthru
      _
    // Predicated region
    $region86: #{tpu_custom_call.1} parent=1 // pred_check
      _
    $region87: #{tpu_custom_call.1} parent=1 // pred_check_branch
      %169 = sbr.rel (0) target = $region89
    $region88: #{tpu_custom_call.1} parent=1 // pred_region
      %171 = dma.done [#allocation15], 1024
    $region89: #{tpu_custom_call.1} parent=1 // pred_fallthru
      _
    %v172 = vld [vmem:[#allocation2] sm:$0xff]
    %v173 = vld [vmem:[#allocation7] sm:$0xf]
    %v174 = vld [vmem:[#allocation7 + $0x4] sm:$0xf]
    %v175 = vld [vmem:[#allocation7 + $0x8] sm:$0xf]
    %v176 = vld [vmem:[#allocation7 + $0xc] sm:$0xf]
    %v177 = vld [vmem:[#allocation7 + $0x10] sm:$0xf]
    %v178 = vld [vmem:[#allocation7 + $0x14] sm:$0xf]
    %v179 = vld [vmem:[#allocation7 + $0x18] sm:$0xf]
    %v180 = vld [vmem:[#allocation7 + $0x1c] sm:$0xf]
    %v181 = vld [vmem:[#allocation7 + $0x20] sm:$0xf]
    %v182 = vld [vmem:[#allocation7 + $0x24] sm:$0xf]
    %v183 = vld [vmem:[#allocation7 + $0x28] sm:$0xf]
    %v184 = vld [vmem:[#allocation7 + $0x2c] sm:$0xf]
    %v185 = vld [vmem:[#allocation7 + $0x30] sm:$0xf]
    %v186 = vld [vmem:[#allocation7 + $0x34] sm:$0xf]
    %v187 = vld [vmem:[#allocation7 + $0x38] sm:$0xf]
    %v188 = vld [vmem:[#allocation7 + $0x3c] sm:$0xf]
    %v189 = vld [vmem:[%s3] sm:$0x1]
    %v190 = vpack.c.bf16 %v172, %v172
    %v192 = vperm.slane %v189, 0
    %v210 = vunpack.c.l.b16 %v173
    %v211 = vunpack.c.l.b16 %v174
    %v212 = vunpack.c.l.b16 %v175
    %v213 = vunpack.c.l.b16 %v176
    %v214 = vunpack.c.l.b16 %v177
    %v215 = vunpack.c.l.b16 %v178
    %v216 = vunpack.c.l.b16 %v179
    %v217 = vunpack.c.l.b16 %v180
    %v218 = vunpack.c.l.b16 %v181
    %v219 = vunpack.c.l.b16 %v182
    %v220 = vunpack.c.l.b16 %v183
    %v221 = vunpack.c.l.b16 %v184
    %v222 = vunpack.c.l.b16 %v185
    %v223 = vunpack.c.l.b16 %v186
    %v224 = vunpack.c.l.b16 %v187
    %v225 = vunpack.c.l.b16 %v188
    %v226 = vpack.c.b16 %v211, %v210
    %v227 = vpack.c.b16 %v213, %v212
    %v228 = vpack.c.b16 %v215, %v214
    %v229 = vpack.c.b16 %v217, %v216
    %v230 = vpack.c.b16 %v219, %v218
    %v231 = vpack.c.b16 %v221, %v220
    %v232 = vpack.c.b16 %v223, %v222
    %v233 = vpack.c.b16 %v225, %v224
    %242 = vmatpush.bf16.msra.mxu0 %v233
    %243 = vmatpush.bf16.msra.mxu0 %v232
    %244 = vmatpush.bf16.msra.mxu0 %v231
    %245 = vmatpush.bf16.msra.mxu0 %v230
    %246 = vmatpush.bf16.msra.mxu0 %v229
    %247 = vmatpush.bf16.msra.mxu0 %v228
    %248 = vmatpush.bf16.msra.mxu0 %v227
    %249 = vmatpush.bf16.msra.mxu0 %v226
    %250 = vmatmul.bf16.gmra.mxu0 %v190
    %v251 = vpop.f32.mrf.mxu0
    %v252 = vadd.f32 %v192, %v251
    %v253 = vpop.f32.mrf.mxu0
    %254 = vdwg.mxu0
    %v255 = vmax.f32 %v252, 0.0
    %v256 = vld [vmem:[#allocation8] sm:$0xf]
    %v257 = vld [vmem:[#allocation8 + $0x4] sm:$0xf]
    %v258 = vld [vmem:[#allocation8 + $0x8] sm:$0xf]
    %v259 = vld [vmem:[#allocation8 + $0xc] sm:$0xf]
    %v260 = vld [vmem:[#allocation8 + $0x10] sm:$0xf]
    %v261 = vld [vmem:[#allocation8 + $0x14] sm:$0xf]
    %v262 = vld [vmem:[#allocation8 + $0x18] sm:$0xf]
    %v263 = vld [vmem:[#allocation8 + $0x1c] sm:$0xf]
    %v264 = vld [vmem:[#allocation8 + $0x20] sm:$0xf]
    %v265 = vld [vmem:[#allocation8 + $0x24] sm:$0xf]
    %v266 = vld [vmem:[#allocation8 + $0x28] sm:$0xf]
    %v267 = vld [vmem:[#allocation8 + $0x2c] sm:$0xf]
    %v268 = vld [vmem:[#allocation8 + $0x30] sm:$0xf]
    %v269 = vld [vmem:[#allocation8 + $0x34] sm:$0xf]
    %v270 = vld [vmem:[#allocation8 + $0x38] sm:$0xf]
    %v271 = vld [vmem:[#allocation8 + $0x3c] sm:$0xf]
    %v272 = vld [vmem:[%s5] sm:$0x1]
    %v273 = vpack.c.bf16 %v255, %v255
    %v275 = vperm.slane %v272, 0
    %v293 = vunpack.c.l.b16 %v256
    %v294 = vunpack.c.l.b16 %v257
    %v295 = vunpack.c.l.b16 %v258
    %v296 = vunpack.c.l.b16 %v259
    %v297 = vunpack.c.l.b16 %v260
    %v298 = vunpack.c.l.b16 %v261
    %v299 = vunpack.c.l.b16 %v262
    %v300 = vunpack.c.l.b16 %v263
    %v301 = vunpack.c.l.b16 %v264
    %v302 = vunpack.c.l.b16 %v265
    %v303 = vunpack.c.l.b16 %v266
    %v304 = vunpack.c.l.b16 %v267
    %v305 = vunpack.c.l.b16 %v268
    %v306 = vunpack.c.l.b16 %v269
    %v307 = vunpack.c.l.b16 %v270
    %v308 = vunpack.c.l.b16 %v271
    %v309 = vpack.c.b16 %v294, %v293
    %v310 = vpack.c.b16 %v296, %v295
    %v311 = vpack.c.b16 %v298, %v297
    %v312 = vpack.c.b16 %v300, %v299
    %v313 = vpack.c.b16 %v302, %v301
    %v314 = vpack.c.b16 %v304, %v303
    %v315 = vpack.c.b16 %v306, %v305
    %v316 = vpack.c.b16 %v308, %v307
    %325 = vmatpush.bf16.msra.mxu0 %v316
    %326 = vmatpush.bf16.msra.mxu0 %v315
    %327 = vmatpush.bf16.msra.mxu0 %v314
    %328 = vmatpush.bf16.msra.mxu0 %v313
    %329 = vmatpush.bf16.msra.mxu0 %v312
    %330 = vmatpush.bf16.msra.mxu0 %v311
    %331 = vmatpush.bf16.msra.mxu0 %v310
    %332 = vmatpush.bf16.msra.mxu0 %v309
    %333 = vmatmul.bf16.gmra.mxu0 %v273
    %v334 = vpop.f32.mrf.mxu0
    %v335 = vadd.f32 %v275, %v334
    %v336 = vpop.f32.mrf.mxu0
    %337 = vdwg.mxu0
    %v338 = vmax.f32 %v335, 0.0
    %v339 = vld [vmem:[#allocation10] sm:$0xf]
    %v340 = vld [vmem:[#allocation10 + $0x4] sm:$0xf]
    %v341 = vld [vmem:[#allocation10 + $0x8] sm:$0xf]
    %v342 = vld [vmem:[#allocation10 + $0xc] sm:$0xf]
    %v343 = vld [vmem:[#allocation10 + $0x10] sm:$0xf]
    %v344 = vld [vmem:[#allocation10 + $0x14] sm:$0xf]
    %v345 = vld [vmem:[#allocation10 + $0x18] sm:$0xf]
    %v346 = vld [vmem:[#allocation10 + $0x1c] sm:$0xf]
    %v347 = vld [vmem:[#allocation10 + $0x20] sm:$0xf]
    %v348 = vld [vmem:[#allocation10 + $0x24] sm:$0xf]
    %v349 = vld [vmem:[#allocation10 + $0x28] sm:$0xf]
    %v350 = vld [vmem:[#allocation10 + $0x2c] sm:$0xf]
    %v351 = vld [vmem:[#allocation10 + $0x30] sm:$0xf]
    %v352 = vld [vmem:[#allocation10 + $0x34] sm:$0xf]
    %v353 = vld [vmem:[#allocation10 + $0x38] sm:$0xf]
    %v354 = vld [vmem:[#allocation10 + $0x3c] sm:$0xf]
    %v355 = vld [vmem:[%s7] sm:$0x1]
    %v356 = vpack.c.bf16 %v338, %v338
    %v358 = vperm.slane %v355, 0
    %v376 = vunpack.c.l.b16 %v339
    %v377 = vunpack.c.l.b16 %v340
    %v378 = vunpack.c.l.b16 %v341
    %v379 = vunpack.c.l.b16 %v342
    %v380 = vunpack.c.l.b16 %v343
    %v381 = vunpack.c.l.b16 %v344
    %v382 = vunpack.c.l.b16 %v345
    %v383 = vunpack.c.l.b16 %v346
    %v384 = vunpack.c.l.b16 %v347
    %v385 = vunpack.c.l.b16 %v348
    %v386 = vunpack.c.l.b16 %v349
    %v387 = vunpack.c.l.b16 %v350
    %v388 = vunpack.c.l.b16 %v351
    %v389 = vunpack.c.l.b16 %v352
    %v390 = vunpack.c.l.b16 %v353
    %v391 = vunpack.c.l.b16 %v354
    %v392 = vpack.c.b16 %v377, %v376
    %v393 = vpack.c.b16 %v379, %v378
    %v394 = vpack.c.b16 %v381, %v380
    %v395 = vpack.c.b16 %v383, %v382
    %v396 = vpack.c.b16 %v385, %v384
    %v397 = vpack.c.b16 %v387, %v386
    %v398 = vpack.c.b16 %v389, %v388
    %v399 = vpack.c.b16 %v391, %v390
    %408 = vmatpush.bf16.msra.mxu0 %v399
    %409 = vmatpush.bf16.msra.mxu0 %v398
    %410 = vmatpush.bf16.msra.mxu0 %v397
    %411 = vmatpush.bf16.msra.mxu0 %v396
    %412 = vmatpush.bf16.msra.mxu0 %v395
    %413 = vmatpush.bf16.msra.mxu0 %v394
    %414 = vmatpush.bf16.msra.mxu0 %v393
    %415 = vmatpush.bf16.msra.mxu0 %v392
    %416 = vmatmul.bf16.gmra.mxu0 %v356
    %v417 = vpop.f32.mrf.mxu0
    %v418 = vadd.f32 %v358, %v417
    %v419 = vpop.f32.mrf.mxu0
    %420 = vdwg.mxu0
    %421 = vst [vmem:[#allocation16] sm:$0xff] %v418
    %v422 = vld [vmem:[#allocation5] sm:$0xff]
    %v423 = vld [vmem:[#allocation11] sm:$0xf]
    %v424 = vld [vmem:[#allocation11 + $0x4] sm:$0xf]
    %v425 = vld [vmem:[#allocation11 + $0x8] sm:$0xf]
    %v426 = vld [vmem:[#allocation11 + $0xc] sm:$0xf]
    %v427 = vld [vmem:[#allocation11 + $0x10] sm:$0xf]
    %v428 = vld [vmem:[#allocation11 + $0x14] sm:$0xf]
    %v429 = vld [vmem:[#allocation11 + $0x18] sm:$0xf]
    %v430 = vld [vmem:[#allocation11 + $0x1c] sm:$0xf]
    %v431 = vld [vmem:[#allocation11 + $0x20] sm:$0xf]
    %v432 = vld [vmem:[#allocation11 + $0x24] sm:$0xf]
    %v433 = vld [vmem:[#allocation11 + $0x28] sm:$0xf]
    %v434 = vld [vmem:[#allocation11 + $0x2c] sm:$0xf]
    %v435 = vld [vmem:[#allocation11 + $0x30] sm:$0xf]
    %v436 = vld [vmem:[#allocation11 + $0x34] sm:$0xf]
    %v437 = vld [vmem:[#allocation11 + $0x38] sm:$0xf]
    %v438 = vld [vmem:[#allocation11 + $0x3c] sm:$0xf]
    %v439 = vld [vmem:[%s9] sm:$0x1]
    %v440 = vpack.c.bf16 %v422, %v422
    %v442 = vperm.slane %v439, 0
    %v460 = vunpack.c.l.b16 %v423
    %v461 = vunpack.c.l.b16 %v424
    %v462 = vunpack.c.l.b16 %v425
    %v463 = vunpack.c.l.b16 %v426
    %v464 = vunpack.c.l.b16 %v427
    %v465 = vunpack.c.l.b16 %v428
    %v466 = vunpack.c.l.b16 %v429
    %v467 = vunpack.c.l.b16 %v430
    %v468 = vunpack.c.l.b16 %v431
    %v469 = vunpack.c.l.b16 %v432
    %v470 = vunpack.c.l.b16 %v433
    %v471 = vunpack.c.l.b16 %v434
    %v472 = vunpack.c.l.b16 %v435
    %v473 = vunpack.c.l.b16 %v436
    %v474 = vunpack.c.l.b16 %v437
    %v475 = vunpack.c.l.b16 %v438
    %v476 = vpack.c.b16 %v461, %v460
    %v477 = vpack.c.b16 %v463, %v462
    %v478 = vpack.c.b16 %v465, %v464
    %v479 = vpack.c.b16 %v467, %v466
    %v480 = vpack.c.b16 %v469, %v468
    %v481 = vpack.c.b16 %v471, %v470
    %v482 = vpack.c.b16 %v473, %v472
    %v483 = vpack.c.b16 %v475, %v474
    %492 = vmatpush.bf16.msra.mxu0 %v483
    %493 = vmatpush.bf16.msra.mxu0 %v482
    %494 = vmatpush.bf16.msra.mxu0 %v481
    %495 = vmatpush.bf16.msra.mxu0 %v480
    %496 = vmatpush.bf16.msra.mxu0 %v479
    %497 = vmatpush.bf16.msra.mxu0 %v478
    %498 = vmatpush.bf16.msra.mxu0 %v477
    %499 = vmatpush.bf16.msra.mxu0 %v476
    %500 = vmatmul.bf16.gmra.mxu0 %v440
    %v501 = vpop.f32.mrf.mxu0
    %v502 = vadd.f32 %v442, %v501
    %v503 = vpop.f32.mrf.mxu0
    %504 = vdwg.mxu0
    %v505 = vmax.f32 %v502, 0.0
    %v506 = vld [vmem:[#allocation13] sm:$0xf]
    %v507 = vld [vmem:[#allocation13 + $0x4] sm:$0xf]
    %v508 = vld [vmem:[#allocation13 + $0x8] sm:$0xf]
    %v509 = vld [vmem:[#allocation13 + $0xc] sm:$0xf]
    %v510 = vld [vmem:[#allocation13 + $0x10] sm:$0xf]
    %v511 = vld [vmem:[#allocation13 + $0x14] sm:$0xf]
    %v512 = vld [vmem:[#allocation13 + $0x18] sm:$0xf]
    %v513 = vld [vmem:[#allocation13 + $0x1c] sm:$0xf]
    %v514 = vld [vmem:[#allocation13 + $0x20] sm:$0xf]
    %v515 = vld [vmem:[#allocation13 + $0x24] sm:$0xf]
    %v516 = vld [vmem:[#allocation13 + $0x28] sm:$0xf]
    %v517 = vld [vmem:[#allocation13 + $0x2c] sm:$0xf]
    %v518 = vld [vmem:[#allocation13 + $0x30] sm:$0xf]
    %v519 = vld [vmem:[#allocation13 + $0x34] sm:$0xf]
    %v520 = vld [vmem:[#allocation13 + $0x38] sm:$0xf]
    %v521 = vld [vmem:[#allocation13 + $0x3c] sm:$0xf]
    %v522 = vld [vmem:[%s11] sm:$0x1]
    %v523 = vpack.c.bf16 %v505, %v505
    %v525 = vperm.slane %v522, 0
    %v543 = vunpack.c.l.b16 %v506
    %v544 = vunpack.c.l.b16 %v507
    %v545 = vunpack.c.l.b16 %v508
    %v546 = vunpack.c.l.b16 %v509
    %v547 = vunpack.c.l.b16 %v510
    %v548 = vunpack.c.l.b16 %v511
    %v549 = vunpack.c.l.b16 %v512
    %v550 = vunpack.c.l.b16 %v513
    %v551 = vunpack.c.l.b16 %v514
    %v552 = vunpack.c.l.b16 %v515
    %v553 = vunpack.c.l.b16 %v516
    %v554 = vunpack.c.l.b16 %v517
    %v555 = vunpack.c.l.b16 %v518
    %v556 = vunpack.c.l.b16 %v519
    %v557 = vunpack.c.l.b16 %v520
    %v558 = vunpack.c.l.b16 %v521
    %v559 = vpack.c.b16 %v544, %v543
    %v560 = vpack.c.b16 %v546, %v545
    %v561 = vpack.c.b16 %v548, %v547
    %v562 = vpack.c.b16 %v550, %v549
    %v563 = vpack.c.b16 %v552, %v551
    %v564 = vpack.c.b16 %v554, %v553
    %v565 = vpack.c.b16 %v556, %v555
    %v566 = vpack.c.b16 %v558, %v557
    %575 = vmatpush.bf16.msra.mxu0 %v566
    %576 = vmatpush.bf16.msra.mxu0 %v565
    %577 = vmatpush.bf16.msra.mxu0 %v564
    %578 = vmatpush.bf16.msra.mxu0 %v563
    %579 = vmatpush.bf16.msra.mxu0 %v562
    %580 = vmatpush.bf16.msra.mxu0 %v561
    %581 = vmatpush.bf16.msra.mxu0 %v560
    %582 = vmatpush.bf16.msra.mxu0 %v559
    %583 = vmatmul.bf16.gmra.mxu0 %v523
    %v584 = vpop.f32.mrf.mxu0
    %v585 = vadd.f32 %v525, %v584
    %v586 = vpop.f32.mrf.mxu0
    %587 = vdwg.mxu0
    %v588 = vmax.f32 %v585, 0.0
    %v589 = vld [vmem:[#allocation14] sm:$0xf]
    %v590 = vld [vmem:[#allocation14 + $0x4] sm:$0xf]
    %v591 = vld [vmem:[#allocation14 + $0x8] sm:$0xf]
    %v592 = vld [vmem:[#allocation14 + $0xc] sm:$0xf]
    %v593 = vld [vmem:[#allocation14 + $0x10] sm:$0xf]
    %v594 = vld [vmem:[#allocation14 + $0x14] sm:$0xf]
    %v595 = vld [vmem:[#allocation14 + $0x18] sm:$0xf]
    %v596 = vld [vmem:[#allocation14 + $0x1c] sm:$0xf]
    %v597 = vld [vmem:[#allocation14 + $0x20] sm:$0xf]
    %v598 = vld [vmem:[#allocation14 + $0x24] sm:$0xf]
    %v599 = vld [vmem:[#allocation14 + $0x28] sm:$0xf]
    %v600 = vld [vmem:[#allocation14 + $0x2c] sm:$0xf]
    %v601 = vld [vmem:[#allocation14 + $0x30] sm:$0xf]
    %v602 = vld [vmem:[#allocation14 + $0x34] sm:$0xf]
    %v603 = vld [vmem:[#allocation14 + $0x38] sm:$0xf]
    %v604 = vld [vmem:[#allocation14 + $0x3c] sm:$0xf]
    %v605 = vld [vmem:[%s13] sm:$0x1]
    %v606 = vpack.c.bf16 %v588, %v588
    %v608 = vperm.slane %v605, 0
    %v626 = vunpack.c.l.b16 %v589
    %v627 = vunpack.c.l.b16 %v590
    %v628 = vunpack.c.l.b16 %v591
    %v629 = vunpack.c.l.b16 %v592
    %v630 = vunpack.c.l.b16 %v593
    %v631 = vunpack.c.l.b16 %v594
    %v632 = vunpack.c.l.b16 %v595
    %v633 = vunpack.c.l.b16 %v596
    %v634 = vunpack.c.l.b16 %v597
    %v635 = vunpack.c.l.b16 %v598
    %v636 = vunpack.c.l.b16 %v599
    %v637 = vunpack.c.l.b16 %v600
    %v638 = vunpack.c.l.b16 %v601
    %v639 = vunpack.c.l.b16 %v602
    %v640 = vunpack.c.l.b16 %v603
    %v641 = vunpack.c.l.b16 %v604
    %v642 = vpack.c.b16 %v627, %v626
    %v643 = vpack.c.b16 %v629, %v628
    %v644 = vpack.c.b16 %v631, %v630
    %v645 = vpack.c.b16 %v633, %v632
    %v646 = vpack.c.b16 %v635, %v634
    %v647 = vpack.c.b16 %v637, %v636
    %v648 = vpack.c.b16 %v639, %v638
    %v649 = vpack.c.b16 %v641, %v640
    %658 = vmatpush.bf16.msra.mxu0 %v649
    %659 = vmatpush.bf16.msra.mxu0 %v648
    %660 = vmatpush.bf16.msra.mxu0 %v647
    %661 = vmatpush.bf16.msra.mxu0 %v646
    %662 = vmatpush.bf16.msra.mxu0 %v645
    %663 = vmatpush.bf16.msra.mxu0 %v644
    %664 = vmatpush.bf16.msra.mxu0 %v643
    %665 = vmatpush.bf16.msra.mxu0 %v642
    %666 = vmatmul.bf16.gmra.mxu0 %v606
    %v667 = vpop.f32.mrf.mxu0
    %v668 = vadd.f32 %v608, %v667
    %v669 = vpop.f32.mrf.mxu0
    %670 = vdwg.mxu0
    %671 = vst [vmem:[#allocation17] sm:$0xff] %v668
    // Predicated region
    $region90: #{tpu_custom_call.1} parent=1 // pred_check
      _
    $region91: #{tpu_custom_call.1} parent=1 // pred_check_branch
      %673 = sbr.rel (0) target = $region93
    $region92: #{tpu_custom_call.1} parent=1 // pred_region
      %675 = vsyncadd [#allocation4], 0
      %s677 = sshll.u32 [#allocation16], 4
      %s678 = int_to_ptr.vmem [resolvable:$true] %s677
      %s679 = sshll.u32 %s14, 4
      %s680 = int_to_ptr.hbm [resolvable:$true] %s679
      %682 = dma.vmem_to_hbm [thread:$0]  %s678, 128, %s680, [#allocation4]
    $region93: #{tpu_custom_call.1} parent=1 // pred_fallthru
      _
    // Predicated region
    $region94: #{tpu_custom_call.1} parent=1 // pred_check
      _
    $region95: #{tpu_custom_call.1} parent=1 // pred_check_branch
      %684 = sbr.rel (0) target = $region97
    $region96: #{tpu_custom_call.1} parent=1 // pred_region
      %686 = vsyncadd [#allocation18], 0
      %s688 = sshll.u32 [#allocation17], 4
      %s689 = int_to_ptr.vmem [resolvable:$true] %s688
      %s690 = sshll.u32 %s15, 4
      %s691 = int_to_ptr.hbm [resolvable:$true] %s690
      %693 = dma.vmem_to_hbm [thread:$0]  %s689, 128, %s691, [#allocation18]
    $region97: #{tpu_custom_call.1} parent=1 // pred_fallthru
      _
    // Predicated region
    $region98: #{tpu_custom_call.1} parent=1 // pred_check
      _
    $region99: #{tpu_custom_call.1} parent=1 // pred_check_branch
      %695 = sbr.rel (0) target = $region101
    $region100: #{tpu_custom_call.1} parent=1 // pred_region
      %697 = dma.done [#allocation4], 128
    $region101: #{tpu_custom_call.1} parent=1 // pred_fallthru
      _
    // Predicated region
    $region102: #{tpu_custom_call.1} parent=1 // pred_check
      _
    $region103: #{tpu_custom_call.1} parent=1 // pred_check_branch
      %699 = sbr.rel (0) target = $region105
    $region104: #{tpu_custom_call.1} parent=1 // pred_region
      %701 = dma.done [#allocation18], 128
    $region105: #{tpu_custom_call.1} parent=1 // pred_fallthru
      _
    %702 = vsyncpa [#allocation3], 1
    %703 = vsyncpa [#allocation6], 1
    %704 = vsyncpa [#allocation9], 1
    %705 = vsyncpa [#allocation12], 1
    %706 = vsyncpa [#allocation15], 1
    %707 = vsyncpa [#allocation4], 1
    %708 = vsyncpa [#allocation18], 1

// kernel: tpu_custom_call.1
$region0: #{tpu_custom_call.1}
  #allocation0 [shape = 'u32[]', space=smem, size = 0x4, offset = 0x4, fixed_abs, tag = 'smem constant byte address 0x4 - core index']
  #allocation1 [shape = 'u32[72,128]{1,0:T(1,128)}', space=vmem, size = 0x9000, scoped, tag = 'internal scratch']
  %s0 = inlined_call_operand.hbm [shape: f32[8,128], index: 0, kind: input, shape index: {}]
  %s1 = inlined_call_operand.hbm [shape: f32[8,128], index: 1, kind: input, shape index: {}]
  %s2 = inlined_call_operand.hbm [shape: bf16[128,128], index: 2, kind: input, shape index: {}]
  %s3 = inlined_call_operand.vmem [shape: f32[1,128], index: 3, kind: input, shape index: {}]
  %s4 = inlined_call_operand.hbm [shape: bf16[128,128], index: 4, kind: input, shape index: {}]
  %s5 = inlined_call_operand.vmem [shape: f32[1,128], index: 5, kind: input, shape index: {}]
  %s6 = inlined_call_operand.hbm [shape: bf16[128,128], index: 6, kind: input, shape index: {}]
  %s7 = inlined_call_operand.vmem [shape: f32[1,128], index: 7, kind: input, shape index: {}]
  %s8 = inlined_call_operand.hbm [shape: bf16[128,128], index: 8, kind: input, shape index: {}]
  %s9 = inlined_call_operand.vmem [shape: f32[1,128], index: 9, kind: input, shape index: {}]
  %s10 = inlined_call_operand.hbm [shape: bf16[128,128], index: 10, kind: input, shape index: {}]
  %s11 = inlined_call_operand.vmem [shape: f32[1,128], index: 11, kind: input, shape index: {}]
  %s12 = inlined_call_operand.hbm [shape: bf16[128,128], index: 12, kind: input, shape index: {}]
  %s13 = inlined_call_operand.vmem [shape: f32[1,128], index: 13, kind: input, shape index: {}]
  %s14 = inlined_call_operand.hbm [shape: f32[8,128], index: 14, kind: output, shape index: {0}]
  %s15 = inlined_call_operand.hbm [shape: f32[8,128], index: 15, kind: output, shape index: {1}]
  %16 = xla_tuple %s14, %s15
  %s17 = sld [smem:[#allocation0]]
  $region106: #{tpu_custom_call.1} parent=0
    _
  %s19 = ssub.s32 1, %s17
  %s20 = scalar_select 0, %s19, %s17
  $region1: #{tpu_custom_call.1} parent=0
    #allocation2 [shape = 'u8[4096]{0}', space=vmem, size = 0x1000, scoped, tag = 'input window, operand 0, single buffered']
    #allocation3 [shape = 's32[1]{0}', space=sflag, size = 0x4, scoped, tag = 'scoped memory for tpu_custom_call.1']
    #allocation4 [shape = 's32[1]{0}', space=sflag, size = 0x4, scoped, tag = 'scoped memory for tpu_custom_call.1']
    #allocation5 [shape = 'u8[4096]{0}', space=vmem, size = 0x1000, scoped, tag = 'input window, operand 1, single buffered']
    #allocation6 [shape = 's32[1]{0}', space=sflag, size = 0x4, scoped, tag = 'scoped memory for tpu_custom_call.1']
    #allocation7 [shape = 'u8[32768]{0}', space=vmem, size = 0x8000, scoped, tag = 'input window, operand 2, single buffered']
    #allocation8 [shape = 'u8[32768]{0}', space=vmem, size = 0x8000, scoped, tag = 'input window, operand 4, single buffered']
    #allocation9 [shape = 's32[1]{0}', space=sflag, size = 0x4, scoped, tag = 'scoped memory for tpu_custom_call.1']
    #allocation10 [shape = 'u8[32768]{0}', space=vmem, size = 0x8000, scoped, tag = 'input window, operand 6, single buffered']
    #allocation11 [shape = 'u8[32768]{0}', space=vmem, size = 0x8000, scoped, tag = 'input window, operand 8, single buffered']
    #allocation12 [shape = 's32[1]{0}', space=sflag, size = 0x4, scoped, tag = 'scoped memory for tpu_custom_call.1']
    #allocation13 [shape = 'u8[32768]{0}', space=vmem, size = 0x8000, scoped, tag = 'input window, operand 10, single buffered']
    #allocation14 [shape = 'u8[32768]{0}', space=vmem, size = 0x8000, scoped, tag = 'input window, operand 12, single buffered']
    #allocation15 [shape = 's32[1]{0}', space=sflag, size = 0x4, scoped, tag = 'scoped memory for tpu_custom_call.1']
    #allocation16 [shape = 'u8[4096]{0}', space=vmem, size = 0x1000, scoped, tag = 'output window, operand 0, single buffered']
    #allocation17 [shape = 'u8[4096]{0}', space=vmem, size = 0x1000, scoped, tag = 'output window, operand 1, single buffered']
    #allocation18 [shape = 's32[1]{0}', space=sflag, size = 0x4, scoped, tag = 'scoped memory for tpu_custom_call.1']
    %21 = vsyncpa [#allocation3], 0
    %22 = vsyncpa [#allocation6], 0
    %23 = vsyncpa [#allocation9], 0
    %24 = vsyncpa [#allocation12], 0
    %25 = vsyncpa [#allocation15], 0
    %26 = vsyncpa [#allocation4], 0
    %27 = vsyncpa [#allocation18], 0
    // Predicated region
    $region2: #{tpu_custom_call.1} parent=1 // pred_check
      _
    $region3: #{tpu_custom_call.1} parent=1 // pred_check_branch
      %29 = sbr.rel (0) target = $region5
    $region4: #{tpu_custom_call.1} parent=1 // pred_region
      %31 = vsyncadd [#allocation3], 0
      %s33 = sshll.u32 %s0, 4
      %s34 = int_to_ptr.hbm [resolvable:$true] %s33
      %s35 = sshll.u32 [#allocation2], 4
      %s36 = int_to_ptr.vmem [resolvable:$true] %s35
      %38 = dma.hbm_to_vmem [thread:$0]  %s34, 128, %s36, [#allocation3]
    $region5: #{tpu_custom_call.1} parent=1 // pred_fallthru
      _
    // Predicated region
    $region6: #{tpu_custom_call.1} parent=1 // pred_check
      _
    $region7: #{tpu_custom_call.1} parent=1 // pred_check_branch
      %40 = sbr.rel (0) target = $region9
    $region8: #{tpu_custom_call.1} parent=1 // pred_region
      %42 = vsyncadd [#allocation6], 0
      %s44 = sshll.u32 %s1, 4
      %s45 = int_to_ptr.hbm [resolvable:$true] %s44
      %s46 = sshll.u32 [#allocation5], 4
      %s47 = int_to_ptr.vmem [resolvable:$true] %s46
      %49 = dma.hbm_to_vmem [thread:$0]  %s45, 128, %s47, [#allocation6]
    $region9: #{tpu_custom_call.1} parent=1 // pred_fallthru
      _
    // Predicated region
    $region10: #{tpu_custom_call.1} parent=1 // pred_check
      _
    $region11: #{tpu_custom_call.1} parent=1 // pred_check_branch
      %51 = sbr.rel (0) target = $region13
    $region12: #{tpu_custom_call.1} parent=1 // pred_region
      %53 = vsyncadd [#allocation6], 0
      %s54 = sshll.u32 %s2, 4
      %s55 = int_to_ptr.hbm [resolvable:$true] %s54
      %s56 = sshll.u32 [#allocation7], 4
      %s57 = int_to_ptr.vmem [resolvable:$true] %s56
      %62 = dma.hbm_to_vmem [thread:$0]  %s55, 1024, %s57, [#allocation6], 64, 64, 4
    $region13: #{tpu_custom_call.1} parent=1 // pred_fallthru
      _
    // Predicated region
    $region14: #{tpu_custom_call.1} parent=1 // pred_check
      _
    $region15: #{tpu_custom_call.1} parent=1 // pred_check_branch
      %64 = sbr.rel (0) target = $region17
    $region16: #{tpu_custom_call.1} parent=1 // pred_region
      _
    $region17: #{tpu_custom_call.1} parent=1 // pred_fallthru
      _
    // Predicated region
    $region18: #{tpu_custom_call.1} parent=1 // pred_check
      _
    $region19: #{tpu_custom_call.1} parent=1 // pred_check_branch
      %66 = sbr.rel (0) target = $region21
    $region20: #{tpu_custom_call.1} parent=1 // pred_region
      %68 = vsyncadd [#allocation9], 0
      %s69 = sshll.u32 %s4, 4
      %s70 = int_to_ptr.hbm [resolvable:$true] %s69
      %s71 = sshll.u32 [#allocation8], 4
      %s72 = int_to_ptr.vmem [resolvable:$true] %s71
      %77 = dma.hbm_to_vmem [thread:$0]  %s70, 1024, %s72, [#allocation9], 64, 64, 4
    $region21: #{tpu_custom_call.1} parent=1 // pred_fallthru
      _
    // Predicated region
    $region22: #{tpu_custom_call.1} parent=1 // pred_check
      _
    $region23: #{tpu_custom_call.1} parent=1 // pred_check_branch
      %79 = sbr.rel (0) target = $region25
    $region24: #{tpu_custom_call.1} parent=1 // pred_region
      _
    $region25: #{tpu_custom_call.1} parent=1 // pred_fallthru
      _
    // Predicated region
    $region26: #{tpu_custom_call.1} parent=1 // pred_check
      _
    $region27: #{tpu_custom_call.1} parent=1 // pred_check_branch
      %81 = sbr.rel (0) target = $region29
    $region28: #{tpu_custom_call.1} parent=1 // pred_region
      %83 = vsyncadd [#allocation9], 0
      %s84 = sshll.u32 %s6, 4
      %s85 = int_to_ptr.hbm [resolvable:$true] %s84
      %s86 = sshll.u32 [#allocation10], 4
      %s87 = int_to_ptr.vmem [resolvable:$true] %s86
      %92 = dma.hbm_to_vmem [thread:$0]  %s85, 1024, %s87, [#allocation9], 64, 64, 4
    $region29: #{tpu_custom_call.1} parent=1 // pred_fallthru
      _
    // Predicated region
    $region30: #{tpu_custom_call.1} parent=1 // pred_check
      _
    $region31: #{tpu_custom_call.1} parent=1 // pred_check_branch
      %94 = sbr.rel (0) target = $region33
    $region32: #{tpu_custom_call.1} parent=1 // pred_region
      _
    $region33: #{tpu_custom_call.1} parent=1 // pred_fallthru
      _
    // Predicated region
    $region34: #{tpu_custom_call.1} parent=1 // pred_check
      _
    $region35: #{tpu_custom_call.1} parent=1 // pred_check_branch
      %96 = sbr.rel (0) target = $region37
    $region36: #{tpu_custom_call.1} parent=1 // pred_region
      %98 = vsyncadd [#allocation12], 0
      %s99 = sshll.u32 %s8, 4
      %s100 = int_to_ptr.hbm [resolvable:$true] %s99
      %s101 = sshll.u32 [#allocation11], 4
      %s102 = int_to_ptr.vmem [resolvable:$true] %s101
      %107 = dma.hbm_to_vmem [thread:$0]  %s100, 1024, %s102, [#allocation12], 64, 64, 4
    $region37: #{tpu_custom_call.1} parent=1 // pred_fallthru
      _
    // Predicated region
    $region38: #{tpu_custom_call.1} parent=1 // pred_check
      _
    $region39: #{tpu_custom_call.1} parent=1 // pred_check_branch
      %109 = sbr.rel (0) target = $region41
    $region40: #{tpu_custom_call.1} parent=1 // pred_region
      _
    $region41: #{tpu_custom_call.1} parent=1 // pred_fallthru
      _
    // Predicated region
    $region42: #{tpu_custom_call.1} parent=1 // pred_check
      _
    $region43: #{tpu_custom_call.1} parent=1 // pred_check_branch
      %111 = sbr.rel (0) target = $region45
    $region44: #{tpu_custom_call.1} parent=1 // pred_region
      %113 = vsyncadd [#allocation12], 0
      %s114 = sshll.u32 %s10, 4
      %s115 = int_to_ptr.hbm [resolvable:$true] %s114
      %s116 = sshll.u32 [#allocation13], 4
      %s117 = int_to_ptr.vmem [resolvable:$true] %s116
      %122 = dma.hbm_to_vmem [thread:$0]  %s115, 1024, %s117, [#allocation12], 64, 64, 4
    $region45: #{tpu_custom_call.1} parent=1 // pred_fallthru
      _
    // Predicated region
    $region46: #{tpu_custom_call.1} parent=1 // pred_check
      _
    $region47: #{tpu_custom_call.1} parent=1 // pred_check_branch
      %124 = sbr.rel (0) target = $region49
    $region48: #{tpu_custom_call.1} parent=1 // pred_region
      _
    $region49: #{tpu_custom_call.1} parent=1 // pred_fallthru
      _
    // Predicated region
    $region50: #{tpu_custom_call.1} parent=1 // pred_check
      _
    $region51: #{tpu_custom_call.1} parent=1 // pred_check_branch
      %126 = sbr.rel (0) target = $region53
    $region52: #{tpu_custom_call.1} parent=1 // pred_region
      %128 = vsyncadd [#allocation15], 0
      %s129 = sshll.u32 %s12, 4
      %s130 = int_to_ptr.hbm [resolvable:$true] %s129
      %s131 = sshll.u32 [#allocation14], 4
      %s132 = int_to_ptr.vmem [resolvable:$true] %s131
      %137 = dma.hbm_to_vmem [thread:$0]  %s130, 1024, %s132, [#allocation15], 64, 64, 4
    $region53: #{tpu_custom_call.1} parent=1 // pred_fallthru
      _
    // Predicated region
    $region54: #{tpu_custom_call.1} parent=1 // pred_check
      _
    $region55: #{tpu_custom_call.1} parent=1 // pred_check_branch
      %139 = sbr.rel (0) target = $region57
    $region56: #{tpu_custom_call.1} parent=1 // pred_region
      _
    $region57: #{tpu_custom_call.1} parent=1 // pred_fallthru
      _
    // Predicated region
    $region58: #{tpu_custom_call.1} parent=1 // pred_check
      _
    $region59: #{tpu_custom_call.1} parent=1 // pred_check_branch
      %141 = sbr.rel (0) target = $region61
    $region60: #{tpu_custom_call.1} parent=1 // pred_region
      %143 = dma.done [#allocation3], 128
    $region61: #{tpu_custom_call.1} parent=1 // pred_fallthru
      _
    // Predicated region
    $region62: #{tpu_custom_call.1} parent=1 // pred_check
      _
    $region63: #{tpu_custom_call.1} parent=1 // pred_check_branch
      %145 = sbr.rel (0) target = $region65
    $region64: #{tpu_custom_call.1} parent=1 // pred_region
      %147 = dma.done [#allocation6], 128
    $region65: #{tpu_custom_call.1} parent=1 // pred_fallthru
      _
    // Predicated region
    $region66: #{tpu_custom_call.1} parent=1 // pred_check
      _
    $region67: #{tpu_custom_call.1} parent=1 // pred_check_branch
      %149 = sbr.rel (0) target = $region69
    $region68: #{tpu_custom_call.1} parent=1 // pred_region
      %151 = dma.done [#allocation6], 1024
    $region69: #{tpu_custom_call.1} parent=1 // pred_fallthru
      _
    // Predicated region
    $region70: #{tpu_custom_call.1} parent=1 // pred_check
      _
    $region71: #{tpu_custom_call.1} parent=1 // pred_check_branch
      %153 = sbr.rel (0) target = $region73
    $region72: #{tpu_custom_call.1} parent=1 // pred_region
      %155 = dma.done [#allocation9], 1024
    $region73: #{tpu_custom_call.1} parent=1 // pred_fallthru
      _
    // Predicated region
    $region74: #{tpu_custom_call.1} parent=1 // pred_check
      _
    $region75: #{tpu_custom_call.1} parent=1 // pred_check_branch
      %157 = sbr.rel (0) target = $region77
    $region76: #{tpu_custom_call.1} parent=1 // pred_region
      %159 = dma.done [#allocation9], 1024
    $region77: #{tpu_custom_call.1} parent=1 // pred_fallthru
      _
    // Predicated region
    $region78: #{tpu_custom_call.1} parent=1 // pred_check
      _
    $region79: #{tpu_custom_call.1} parent=1 // pred_check_branch
      %161 = sbr.rel (0) target = $region81
    $region80: #{tpu_custom_call.1} parent=1 // pred_region
      %163 = dma.done [#allocation12], 1024
    $region81: #{tpu_custom_call.1} parent=1 // pred_fallthru
      _
    // Predicated region
    $region82: #{tpu_custom_call.1} parent=1 // pred_check
      _
    $region83: #{tpu_custom_call.1} parent=1 // pred_check_branch
      %165 = sbr.rel (0) target = $region85
    $region84: #{tpu_custom_call.1} parent=1 // pred_region
      %167 = dma.done [#allocation12], 1024
    $region85: #{tpu_custom_call.1} parent=1 // pred_fallthru
      _
    // Predicated region
    $region86: #{tpu_custom_call.1} parent=1 // pred_check
      _
    $region87: #{tpu_custom_call.1} parent=1 // pred_check_branch
      %169 = sbr.rel (0) target = $region89
    $region88: #{tpu_custom_call.1} parent=1 // pred_region
      %171 = dma.done [#allocation15], 1024
    $region89: #{tpu_custom_call.1} parent=1 // pred_fallthru
      _
    %v172 = vld [vmem:[#allocation2] sm:$0xff]
    %v173 = vld [vmem:[#allocation7] sm:$0xf]
    %v174 = vld [vmem:[#allocation7 + $0x4] sm:$0xf]
    %v175 = vld [vmem:[#allocation7 + $0x8] sm:$0xf]
    %v176 = vld [vmem:[#allocation7 + $0xc] sm:$0xf]
    %v177 = vld [vmem:[#allocation7 + $0x10] sm:$0xf]
    %v178 = vld [vmem:[#allocation7 + $0x14] sm:$0xf]
    %v179 = vld [vmem:[#allocation7 + $0x18] sm:$0xf]
    %v180 = vld [vmem:[#allocation7 + $0x1c] sm:$0xf]
    %v181 = vld [vmem:[#allocation7 + $0x20] sm:$0xf]
    %v182 = vld [vmem:[#allocation7 + $0x24] sm:$0xf]
    %v183 = vld [vmem:[#allocation7 + $0x28] sm:$0xf]
    %v184 = vld [vmem:[#allocation7 + $0x2c] sm:$0xf]
    %v185 = vld [vmem:[#allocation7 + $0x30] sm:$0xf]
    %v186 = vld [vmem:[#allocation7 + $0x34] sm:$0xf]
    %v187 = vld [vmem:[#allocation7 + $0x38] sm:$0xf]
    %v188 = vld [vmem:[#allocation7 + $0x3c] sm:$0xf]
    %v189 = vld [vmem:[%s3] sm:$0x1]
    %v190 = vpack.c.bf16 %v172, %v172
    %v192 = vperm.slane %v189, 0
    %v210 = vunpack.c.l.b16 %v173
    %v211 = vunpack.c.l.b16 %v174
    %v212 = vunpack.c.l.b16 %v175
    %v213 = vunpack.c.l.b16 %v176
    %v214 = vunpack.c.l.b16 %v177
    %v215 = vunpack.c.l.b16 %v178
    %v216 = vunpack.c.l.b16 %v179
    %v217 = vunpack.c.l.b16 %v180
    %v218 = vunpack.c.l.b16 %v181
    %v219 = vunpack.c.l.b16 %v182
    %v220 = vunpack.c.l.b16 %v183
    %v221 = vunpack.c.l.b16 %v184
    %v222 = vunpack.c.l.b16 %v185
    %v223 = vunpack.c.l.b16 %v186
    %v224 = vunpack.c.l.b16 %v187
    %v225 = vunpack.c.l.b16 %v188
    %v226 = vpack.c.b16 %v211, %v210
    %v227 = vpack.c.b16 %v213, %v212
    %v228 = vpack.c.b16 %v215, %v214
    %v229 = vpack.c.b16 %v217, %v216
    %v230 = vpack.c.b16 %v219, %v218
    %v231 = vpack.c.b16 %v221, %v220
    %v232 = vpack.c.b16 %v223, %v222
    %v233 = vpack.c.b16 %v225, %v224
    %242 = vmatpush.bf16.msra.mxu0 %v233
    %243 = vmatpush.bf16.msra.mxu0 %v232
    %244 = vmatpush.bf16.msra.mxu0 %v231
    %245 = vmatpush.bf16.msra.mxu0 %v230
    %246 = vmatpush.bf16.msra.mxu0 %v229
    %247 = vmatpush.bf16.msra.mxu0 %v228
    %248 = vmatpush.bf16.msra.mxu0 %v227
    %249 = vmatpush.bf16.msra.mxu0 %v226
    %250 = vmatmul.bf16.gmra.mxu0 %v190
    %v251 = vpop.f32.mrf.mxu0
    %v252 = vadd.f32 %v192, %v251
    %v253 = vpop.f32.mrf.mxu0
    %254 = vdwg.mxu0
    %v255 = vmax.f32 %v252, 0.0
    %v256 = vld [vmem:[#allocation8] sm:$0xf]
    %v257 = vld [vmem:[#allocation8 + $0x4] sm:$0xf]
    %v258 = vld [vmem:[#allocation8 + $0x8] sm:$0xf]
    %v259 = vld [vmem:[#allocation8 + $0xc] sm:$0xf]
    %v260 = vld [vmem:[#allocation8 + $0x10] sm:$0xf]
    %v261 = vld [vmem:[#allocation8 + $0x14] sm:$0xf]
    %v262 = vld [vmem:[#allocation8 + $0x18] sm:$0xf]
    %v263 = vld [vmem:[#allocation8 + $0x1c] sm:$0xf]
    %v264 = vld [vmem:[#allocation8 + $0x20] sm:$0xf]
    %v265 = vld [vmem:[#allocation8 + $0x24] sm:$0xf]
    %v266 = vld [vmem:[#allocation8 + $0x28] sm:$0xf]
    %v267 = vld [vmem:[#allocation8 + $0x2c] sm:$0xf]
    %v268 = vld [vmem:[#allocation8 + $0x30] sm:$0xf]
    %v269 = vld [vmem:[#allocation8 + $0x34] sm:$0xf]
    %v270 = vld [vmem:[#allocation8 + $0x38] sm:$0xf]
    %v271 = vld [vmem:[#allocation8 + $0x3c] sm:$0xf]
    %v272 = vld [vmem:[%s5] sm:$0x1]
    %v273 = vpack.c.bf16 %v255, %v255
    %v275 = vperm.slane %v272, 0
    %v293 = vunpack.c.l.b16 %v256
    %v294 = vunpack.c.l.b16 %v257
    %v295 = vunpack.c.l.b16 %v258
    %v296 = vunpack.c.l.b16 %v259
    %v297 = vunpack.c.l.b16 %v260
    %v298 = vunpack.c.l.b16 %v261
    %v299 = vunpack.c.l.b16 %v262
    %v300 = vunpack.c.l.b16 %v263
    %v301 = vunpack.c.l.b16 %v264
    %v302 = vunpack.c.l.b16 %v265
    %v303 = vunpack.c.l.b16 %v266
    %v304 = vunpack.c.l.b16 %v267
    %v305 = vunpack.c.l.b16 %v268
    %v306 = vunpack.c.l.b16 %v269
    %v307 = vunpack.c.l.b16 %v270
    %v308 = vunpack.c.l.b16 %v271
    %v309 = vpack.c.b16 %v294, %v293
    %v310 = vpack.c.b16 %v296, %v295
    %v311 = vpack.c.b16 %v298, %v297
    %v312 = vpack.c.b16 %v300, %v299
    %v313 = vpack.c.b16 %v302, %v301
    %v314 = vpack.c.b16 %v304, %v303
    %v315 = vpack.c.b16 %v306, %v305
    %v316 = vpack.c.b16 %v308, %v307
    %325 = vmatpush.bf16.msra.mxu0 %v316
    %326 = vmatpush.bf16.msra.mxu0 %v315
    %327 = vmatpush.bf16.msra.mxu0 %v314
    %328 = vmatpush.bf16.msra.mxu0 %v313
    %329 = vmatpush.bf16.msra.mxu0 %v312
    %330 = vmatpush.bf16.msra.mxu0 %v311
    %331 = vmatpush.bf16.msra.mxu0 %v310
    %332 = vmatpush.bf16.msra.mxu0 %v309
    %333 = vmatmul.bf16.gmra.mxu0 %v273
    %v334 = vpop.f32.mrf.mxu0
    %v335 = vadd.f32 %v275, %v334
    %v336 = vpop.f32.mrf.mxu0
    %337 = vdwg.mxu0
    %v338 = vmax.f32 %v335, 0.0
    %v339 = vld [vmem:[#allocation10] sm:$0xf]
    %v340 = vld [vmem:[#allocation10 + $0x4] sm:$0xf]
    %v341 = vld [vmem:[#allocation10 + $0x8] sm:$0xf]
    %v342 = vld [vmem:[#allocation10 + $0xc] sm:$0xf]
    %v343 = vld [vmem:[#allocation10 + $0x10] sm:$0xf]
    %v344 = vld [vmem:[#allocation10 + $0x14] sm:$0xf]
    %v345 = vld [vmem:[#allocation10 + $0x18] sm:$0xf]
    %v346 = vld [vmem:[#allocation10 + $0x1c] sm:$0xf]
    %v347 = vld [vmem:[#allocation10 + $0x20] sm:$0xf]
    %v348 = vld [vmem:[#allocation10 + $0x24] sm:$0xf]
    %v349 = vld [vmem:[#allocation10 + $0x28] sm:$0xf]
    %v350 = vld [vmem:[#allocation10 + $0x2c] sm:$0xf]
    %v351 = vld [vmem:[#allocation10 + $0x30] sm:$0xf]
    %v352 = vld [vmem:[#allocation10 + $0x34] sm:$0xf]
    %v353 = vld [vmem:[#allocation10 + $0x38] sm:$0xf]
    %v354 = vld [vmem:[#allocation10 + $0x3c] sm:$0xf]
    %v355 = vld [vmem:[%s7] sm:$0x1]
    %v356 = vpack.c.bf16 %v338, %v338
    %v358 = vperm.slane %v355, 0
    %v376 = vunpack.c.l.b16 %v339
    %v377 = vunpack.c.l.b16 %v340
    %v378 = vunpack.c.l.b16 %v341
    %v379 = vunpack.c.l.b16 %v342
    %v380 = vunpack.c.l.b16 %v343
    %v381 = vunpack.c.l.b16 %v344
    %v382 = vunpack.c.l.b16 %v345
    %v383 = vunpack.c.l.b16 %v346
    %v384 = vunpack.c.l.b16 %v347
    %v385 = vunpack.c.l.b16 %v348
    %v386 = vunpack.c.l.b16 %v349
    %v387 = vunpack.c.l.b16 %v350
    %v388 = vunpack.c.l.b16 %v351
    %v389 = vunpack.c.l.b16 %v352
    %v390 = vunpack.c.l.b16 %v353
    %v391 = vunpack.c.l.b16 %v354
    %v392 = vpack.c.b16 %v377, %v376
    %v393 = vpack.c.b16 %v379, %v378
    %v394 = vpack.c.b16 %v381, %v380
    %v395 = vpack.c.b16 %v383, %v382
    %v396 = vpack.c.b16 %v385, %v384
    %v397 = vpack.c.b16 %v387, %v386
    %v398 = vpack.c.b16 %v389, %v388
    %v399 = vpack.c.b16 %v391, %v390
    %408 = vmatpush.bf16.msra.mxu0 %v399
    %409 = vmatpush.bf16.msra.mxu0 %v398
    %410 = vmatpush.bf16.msra.mxu0 %v397
    %411 = vmatpush.bf16.msra.mxu0 %v396
    %412 = vmatpush.bf16.msra.mxu0 %v395
    %413 = vmatpush.bf16.msra.mxu0 %v394
    %414 = vmatpush.bf16.msra.mxu0 %v393
    %415 = vmatpush.bf16.msra.mxu0 %v392
    %416 = vmatmul.bf16.gmra.mxu0 %v356
    %v417 = vpop.f32.mrf.mxu0
    %v418 = vadd.f32 %v358, %v417
    %v419 = vpop.f32.mrf.mxu0
    %420 = vdwg.mxu0
    %421 = vst [vmem:[#allocation16] sm:$0xff] %v418
    %v422 = vld [vmem:[#allocation5] sm:$0xff]
    %v423 = vld [vmem:[#allocation11] sm:$0xf]
    %v424 = vld [vmem:[#allocation11 + $0x4] sm:$0xf]
    %v425 = vld [vmem:[#allocation11 + $0x8] sm:$0xf]
    %v426 = vld [vmem:[#allocation11 + $0xc] sm:$0xf]
    %v427 = vld [vmem:[#allocation11 + $0x10] sm:$0xf]
    %v428 = vld [vmem:[#allocation11 + $0x14] sm:$0xf]
    %v429 = vld [vmem:[#allocation11 + $0x18] sm:$0xf]
    %v430 = vld [vmem:[#allocation11 + $0x1c] sm:$0xf]
    %v431 = vld [vmem:[#allocation11 + $0x20] sm:$0xf]
    %v432 = vld [vmem:[#allocation11 + $0x24] sm:$0xf]
    %v433 = vld [vmem:[#allocation11 + $0x28] sm:$0xf]
    %v434 = vld [vmem:[#allocation11 + $0x2c] sm:$0xf]
    %v435 = vld [vmem:[#allocation11 + $0x30] sm:$0xf]
    %v436 = vld [vmem:[#allocation11 + $0x34] sm:$0xf]
    %v437 = vld [vmem:[#allocation11 + $0x38] sm:$0xf]
    %v438 = vld [vmem:[#allocation11 + $0x3c] sm:$0xf]
    %v439 = vld [vmem:[%s9] sm:$0x1]
    %v440 = vpack.c.bf16 %v422, %v422
    %v442 = vperm.slane %v439, 0
    %v460 = vunpack.c.l.b16 %v423
    %v461 = vunpack.c.l.b16 %v424
    %v462 = vunpack.c.l.b16 %v425
    %v463 = vunpack.c.l.b16 %v426
    %v464 = vunpack.c.l.b16 %v427
    %v465 = vunpack.c.l.b16 %v428
    %v466 = vunpack.c.l.b16 %v429
    %v467 = vunpack.c.l.b16 %v430
    %v468 = vunpack.c.l.b16 %v431
    %v469 = vunpack.c.l.b16 %v432
    %v470 = vunpack.c.l.b16 %v433
    %v471 = vunpack.c.l.b16 %v434
    %v472 = vunpack.c.l.b16 %v435
    %v473 = vunpack.c.l.b16 %v436
    %v474 = vunpack.c.l.b16 %v437
    %v475 = vunpack.c.l.b16 %v438
    %v476 = vpack.c.b16 %v461, %v460
    %v477 = vpack.c.b16 %v463, %v462
    %v478 = vpack.c.b16 %v465, %v464
    %v479 = vpack.c.b16 %v467, %v466
    %v480 = vpack.c.b16 %v469, %v468
    %v481 = vpack.c.b16 %v471, %v470
    %v482 = vpack.c.b16 %v473, %v472
    %v483 = vpack.c.b16 %v475, %v474
    %492 = vmatpush.bf16.msra.mxu0 %v483
    %493 = vmatpush.bf16.msra.mxu0 %v482
    %494 = vmatpush.bf16.msra.mxu0 %v481
    %495 = vmatpush.bf16.msra.mxu0 %v480
    %496 = vmatpush.bf16.msra.mxu0 %v479
    %497 = vmatpush.bf16.msra.mxu0 %v478
    %498 = vmatpush.bf16.msra.mxu0 %v477
    %499 = vmatpush.bf16.msra.mxu0 %v476
    %500 = vmatmul.bf16.gmra.mxu0 %v440
    %v501 = vpop.f32.mrf.mxu0
    %v502 = vadd.f32 %v442, %v501
    %v503 = vpop.f32.mrf.mxu0
    %504 = vdwg.mxu0
    %v505 = vmax.f32 %v502, 0.0
    %v506 = vld [vmem:[#allocation13] sm:$0xf]
    %v507 = vld [vmem:[#allocation13 + $0x4] sm:$0xf]
    %v508 = vld [vmem:[#allocation13 + $0x8] sm:$0xf]
    %v509 = vld [vmem:[#allocation13 + $0xc] sm:$0xf]
    %v510 = vld [vmem:[#allocation13 + $0x10] sm:$0xf]
    %v511 = vld [vmem:[#allocation13 + $0x14] sm:$0xf]
    %v512 = vld [vmem:[#allocation13 + $0x18] sm:$0xf]
    %v513 = vld [vmem:[#allocation13 + $0x1c] sm:$0xf]
    %v514 = vld [vmem:[#allocation13 + $0x20] sm:$0xf]
    %v515 = vld [vmem:[#allocation13 + $0x24] sm:$0xf]
    %v516 = vld [vmem:[#allocation13 + $0x28] sm:$0xf]
    %v517 = vld [vmem:[#allocation13 + $0x2c] sm:$0xf]
    %v518 = vld [vmem:[#allocation13 + $0x30] sm:$0xf]
    %v519 = vld [vmem:[#allocation13 + $0x34] sm:$0xf]
    %v520 = vld [vmem:[#allocation13 + $0x38] sm:$0xf]
    %v521 = vld [vmem:[#allocation13 + $0x3c] sm:$0xf]
    %v522 = vld [vmem:[%s11] sm:$0x1]
    %v523 = vpack.c.bf16 %v505, %v505
    %v525 = vperm.slane %v522, 0
    %v543 = vunpack.c.l.b16 %v506
    %v544 = vunpack.c.l.b16 %v507
    %v545 = vunpack.c.l.b16 %v508
    %v546 = vunpack.c.l.b16 %v509
    %v547 = vunpack.c.l.b16 %v510
    %v548 = vunpack.c.l.b16 %v511
    %v549 = vunpack.c.l.b16 %v512
    %v550 = vunpack.c.l.b16 %v513
    %v551 = vunpack.c.l.b16 %v514
    %v552 = vunpack.c.l.b16 %v515
    %v553 = vunpack.c.l.b16 %v516
    %v554 = vunpack.c.l.b16 %v517
    %v555 = vunpack.c.l.b16 %v518
    %v556 = vunpack.c.l.b16 %v519
    %v557 = vunpack.c.l.b16 %v520
    %v558 = vunpack.c.l.b16 %v521
    %v559 = vpack.c.b16 %v544, %v543
    %v560 = vpack.c.b16 %v546, %v545
    %v561 = vpack.c.b16 %v548, %v547
    %v562 = vpack.c.b16 %v550, %v549
    %v563 = vpack.c.b16 %v552, %v551
    %v564 = vpack.c.b16 %v554, %v553
    %v565 = vpack.c.b16 %v556, %v555
    %v566 = vpack.c.b16 %v558, %v557
    %575 = vmatpush.bf16.msra.mxu0 %v566
    %576 = vmatpush.bf16.msra.mxu0 %v565
    %577 = vmatpush.bf16.msra.mxu0 %v564
    %578 = vmatpush.bf16.msra.mxu0 %v563
    %579 = vmatpush.bf16.msra.mxu0 %v562
    %580 = vmatpush.bf16.msra.mxu0 %v561
    %581 = vmatpush.bf16.msra.mxu0 %v560
    %582 = vmatpush.bf16.msra.mxu0 %v559
    %583 = vmatmul.bf16.gmra.mxu0 %v523
    %v584 = vpop.f32.mrf.mxu0
    %v585 = vadd.f32 %v525, %v584
    %v586 = vpop.f32.mrf.mxu0
    %587 = vdwg.mxu0
    %v588 = vmax.f32 %v585, 0.0
    %v589 = vld [vmem:[#allocation14] sm:$0xf]
    %v590 = vld [vmem:[#allocation14 + $0x4] sm:$0xf]
    %v591 = vld [vmem:[#allocation14 + $0x8] sm:$0xf]
    %v592 = vld [vmem:[#allocation14 + $0xc] sm:$0xf]
    %v593 = vld [vmem:[#allocation14 + $0x10] sm:$0xf]
    %v594 = vld [vmem:[#allocation14 + $0x14] sm:$0xf]
    %v595 = vld [vmem:[#allocation14 + $0x18] sm:$0xf]
    %v596 = vld [vmem:[#allocation14 + $0x1c] sm:$0xf]
    %v597 = vld [vmem:[#allocation14 + $0x20] sm:$0xf]
    %v598 = vld [vmem:[#allocation14 + $0x24] sm:$0xf]
    %v599 = vld [vmem:[#allocation14 + $0x28] sm:$0xf]
    %v600 = vld [vmem:[#allocation14 + $0x2c] sm:$0xf]
    %v601 = vld [vmem:[#allocation14 + $0x30] sm:$0xf]
    %v602 = vld [vmem:[#allocation14 + $0x34] sm:$0xf]
    %v603 = vld [vmem:[#allocation14 + $0x38] sm:$0xf]
    %v604 = vld [vmem:[#allocation14 + $0x3c] sm:$0xf]
    %v605 = vld [vmem:[%s13] sm:$0x1]
    %v606 = vpack.c.bf16 %v588, %v588
    %v608 = vperm.slane %v605, 0
    %v626 = vunpack.c.l.b16 %v589
    %v627 = vunpack.c.l.b16 %v590
    %v628 = vunpack.c.l.b16 %v591
    %v629 = vunpack.c.l.b16 %v592
    %v630 = vunpack.c.l.b16 %v593
    %v631 = vunpack.c.l.b16 %v594
    %v632 = vunpack.c.l.b16 %v595
    %v633 = vunpack.c.l.b16 %v596
    %v634 = vunpack.c.l.b16 %v597
    %v635 = vunpack.c.l.b16 %v598
    %v636 = vunpack.c.l.b16 %v599
    %v637 = vunpack.c.l.b16 %v600
    %v638 = vunpack.c.l.b16 %v601
    %v639 = vunpack.c.l.b16 %v602
    %v640 = vunpack.c.l.b16 %v603
    %v641 = vunpack.c.l.b16 %v604
    %v642 = vpack.c.b16 %v627, %v626
    %v643 = vpack.c.b16 %v629, %v628
    %v644 = vpack.c.b16 %v631, %v630
    %v645 = vpack.c.b16 %v633, %v632
    %v646 = vpack.c.b16 %v635, %v634
    %v647 = vpack.c.b16 %v637, %v636
    %v648 = vpack.c.b16 %v639, %v638
    %v649 = vpack.c.b16 %v641, %v640
    %658 = vmatpush.bf16.msra.mxu0 %v649
    %659 = vmatpush.bf16.msra.mxu0 %v648
    %660 = vmatpush.bf16.msra.mxu0 %v647
    %661 = vmatpush.bf16.msra.mxu0 %v646
    %662 = vmatpush.bf16.msra.mxu0 %v645
    %663 = vmatpush.bf16.msra.mxu0 %v644
    %664 = vmatpush.bf16.msra.mxu0 %v643
    %665 = vmatpush.bf16.msra.mxu0 %v642
    %666 = vmatmul.bf16.gmra.mxu0 %v606
    %v667 = vpop.f32.mrf.mxu0
    %v668 = vadd.f32 %v608, %v667
    %v669 = vpop.f32.mrf.mxu0
    %670 = vdwg.mxu0
    %671 = vst [vmem:[#allocation17] sm:$0xff] %v668
    // Predicated region
    $region90: #{tpu_custom_call.1} parent=1 // pred_check
      _
    $region91: #{tpu_custom_call.1} parent=1 // pred_check_branch
      %673 = sbr.rel (0) target = $region93
    $region92: #{tpu_custom_call.1} parent=1 // pred_region
      %675 = vsyncadd [#allocation4], 0
      %s677 = sshll.u32 [#allocation16], 4
      %s678 = int_to_ptr.vmem [resolvable:$true] %s677
      %s679 = sshll.u32 %s14, 4
      %s680 = int_to_ptr.hbm [resolvable:$true] %s679
      %682 = dma.vmem_to_hbm [thread:$0]  %s678, 128, %s680, [#allocation4]
    $region93: #{tpu_custom_call.1} parent=1 // pred_fallthru
      _
    // Predicated region
    $region94: #{tpu_custom_call.1} parent=1 // pred_check
      _
    $region95: #{tpu_custom_call.1} parent=1 // pred_check_branch
      %684 = sbr.rel (0) target = $region97
    $region96: #{tpu_custom_call.1} parent=1 // pred_region
      %686 = vsyncadd [#allocation18], 0
      %s688 = sshll.u32 [#allocation17], 4
      %s689 = int_to_ptr.vmem [resolvable:$true] %s688
      %s690 = sshll.u32 %s15, 4
      %s691 = int_to_ptr.hbm [resolvable:$true] %s690
      %693 = dma.vmem_to_hbm [thread:$0]  %s689, 128, %s691, [#allocation18]
    $region97: #{tpu_custom_call.1} parent=1 // pred_fallthru
      _
    // Predicated region
    $region98: #{tpu_custom_call.1} parent=1 // pred_check
      _
    $region99: #{tpu_custom_call.1} parent=1 // pred_check_branch
      %695 = sbr.rel (0) target = $region101
    $region100: #{tpu_custom_call.1} parent=1 // pred_region
      %697 = dma.done [#allocation4], 128
    $region101: #{tpu_custom_call.1} parent=1 // pred_fallthru
      _
    // Predicated region
    $region102: #{tpu_custom_call.1} parent=1 // pred_check
      _
    $region103: #{tpu_custom_call.1} parent=1 // pred_check_branch
      %699 = sbr.rel (0) target = $region105
    $region104: #{tpu_custom_call.1} parent=1 // pred_region
      %701 = dma.done [#allocation18], 128
    $region105: #{tpu_custom_call.1} parent=1 // pred_fallthru
      _
    %702 = vsyncpa [#allocation3], 1
    %703 = vsyncpa [#allocation6], 1
    %704 = vsyncpa [#allocation9], 1
    %705 = vsyncpa [#allocation12], 1
    %706 = vsyncpa [#allocation15], 1
    %707 = vsyncpa [#allocation4], 1
    %708 = vsyncpa [#allocation18], 1

</llo_original>
